<compile_context>
chip_gen: v6e
topology: v6e:2x2x1
jax: 0.10.0
libtpu: 0.0.40
codegen_flags: <defaults>
</compile_context>

<pallas_src>
import jax
import jax.numpy as jnp
from jax.experimental import pallas as pl
from jax.experimental.pallas import tpu as pltpu


def _residual_block_kernel(x_ref, w1_ref, s1_ref, b1_ref, w2_ref, s2_ref,
                           b2_ref, y_ref):
    """Fused ResidualBlock: grid = (batch n, repeat r).

    x_ref  : (1, H, W, C)      input tile (read only at r == 0; resident)
    w1_ref : (1, C, C2)        1x1 conv weight, bf16
    s1_ref : (1, 1, C2)        folded BN1 scale, f32
    b1_ref : (1, 1, C2)        folded BN1 bias, f32
    w2_ref : (1, 3, 3*C2, C)   3x3 conv weight (di, dj*C2, C), bf16
    s2_ref : (1, 1, C)         folded BN2 scale, f32
    b2_ref : (1, 1, C)         folded BN2 bias, f32
    y_ref  : (1, H, W, C)      output tile; resident accumulator across r
    """
    r = pl.program_id(1)
    _, H, W, C = x_ref.shape
    C2 = w1_ref.shape[2]
    K = 3 * C2
    HW = H * W

    # Load the activation into the resident output tile once per batch element.
    @pl.when(r == 0)
    def _():
        y_ref[...] = x_ref[...]

    x = y_ref[0].astype(jnp.float32)            # (H, W, C), VMEM-resident
    x2d = x.reshape(HW, C)

    # ---- CNNBlock 1: 1x1 conv (bf16 MXU) + folded BN + Swish (f32) ----
    h = jnp.dot(x2d.astype(jnp.bfloat16), w1_ref[0],
                preferred_element_type=jnp.float32)          # (HW, C2)
    h = h * s1_ref[0] + b1_ref[0]
    h = h * jax.nn.sigmoid(h)                                # Swish
    hb = h.astype(jnp.bfloat16).reshape(H, W, C2)

    # ---- 3x3 conv, padding=1, as 3 matmuls with K = 3*C2 ----
    # dj shifts concatenated along the channel (lane) axis.
    zcol = jnp.zeros((H, 1, C2), jnp.bfloat16)
    left = jnp.concatenate([zcol, hb[:, :W - 1, :]], axis=1)   # h[:, j-1]
    right = jnp.concatenate([hb[:, 1:, :], zcol], axis=1)      # h[:, j+1]
    hcat = jnp.concatenate([left, hb, right], axis=-1)         # (H, W, 3*C2)

    # di shifts along the (cheap) leading H axis.
    zrow = jnp.zeros((1, W, K), jnp.bfloat16)
    top = jnp.concatenate([zrow, hcat[:H - 1]], axis=0)        # row i-1
    bot = jnp.concatenate([hcat[1:], zrow], axis=0)            # row i+1

    w2f = w2_ref[0]                                            # (3, K, C) bf16
    acc = jnp.dot(top.reshape(HW, K), w2f[0],
                  preferred_element_type=jnp.float32)
    acc += jnp.dot(hcat.reshape(HW, K), w2f[1],
                   preferred_element_type=jnp.float32)
    acc += jnp.dot(bot.reshape(HW, K), w2f[2],
                   preferred_element_type=jnp.float32)

    acc = acc * s2_ref[0] + b2_ref[0]
    acc = acc * jax.nn.sigmoid(acc)                            # Swish

    # ---- residual add; stays resident in VMEM until the last repeat ----
    y_ref[0] = (x2d + acc).reshape(H, W, C).astype(y_ref.dtype)


def residual_block(x, params):
    """ResidualBlock.forward for all repeats in ONE pallas_call. x: (N,H,W,C)."""
    N, H, W, C = x.shape
    C2 = C // 2
    R = len(params)

    # Stack per-repeat parameters along a leading repeat axis; bf16 weights.
    w1 = jnp.stack([p[0] for p in params]).astype(jnp.bfloat16)       # (R,C,C2)
    s1 = jnp.stack([p[1] for p in params])                            # (R,1,C2)
    b1 = jnp.stack([p[2] for p in params])                            # (R,1,C2)
    w2 = jnp.stack([p[3] for p in params]).reshape(R, 3, 3 * C2, C)
    w2 = w2.astype(jnp.bfloat16)                                      # (R,3,3C2,C)
    s2 = jnp.stack([p[4] for p in params])                            # (R,1,C)
    b2 = jnp.stack([p[5] for p in params])                            # (R,1,C)

    # Rough VMEM budget: x/y tiles (double-buffered) + weights + intermediates.
    tile_bytes = H * W * C * 4
    weight_bytes = (C * C2 + 3 * 3 * C2 * C) * 2
    est = 4 * tile_bytes + 4 * weight_bytes + 8 * H * W * C2 * 4
    vmem_limit = int(min(64 * 2**20, max(32 * 2**20, 2 * est)))

    return pl.pallas_call(
        _residual_block_kernel,
        out_shape=jax.ShapeDtypeStruct((N, H, W, C), x.dtype),
        grid_spec=pltpu.PrefetchScalarGridSpec(
            num_scalar_prefetch=0,
            grid=(N, R),                      # repeat axis innermost
            in_specs=[
                pl.BlockSpec((1, H, W, C), lambda n, r: (n, 0, 0, 0)),
                pl.BlockSpec((1, C, C2), lambda n, r: (r, 0, 0)),
                pl.BlockSpec((1, 1, C2), lambda n, r: (r, 0, 0)),
                pl.BlockSpec((1, 1, C2), lambda n, r: (r, 0, 0)),
                pl.BlockSpec((1, 3, 3 * C2, C), lambda n, r: (r, 0, 0, 0)),
                pl.BlockSpec((1, 1, C), lambda n, r: (r, 0, 0)),
                pl.BlockSpec((1, 1, C), lambda n, r: (r, 0, 0)),
            ],
            out_specs=pl.BlockSpec((1, H, W, C), lambda n, r: (n, 0, 0, 0)),
        ),
        compiler_params=pltpu.CompilerParams(
            dimension_semantics=("parallel", "arbitrary"),
            vmem_limit_bytes=vmem_limit),
    )(x, w1, s1, b1, w2, s2, b2)


def init_params(key, in_channels, num_repeat=1, eps=1e-5):
    """Deterministic synthetic parameters (conv weights + folded BN)."""
    C = in_channels
    C2 = C // 2
    params = []
    for r in range(num_repeat):
        ks = jax.random.split(jax.random.fold_in(key, r), 10)
        # 1x1 conv: PyTorch weight (C2, C, 1, 1) -> stored as (C, C2)
        w1 = jax.random.normal(ks[0], (C, C2), jnp.float32) / jnp.sqrt(C)
        g1 = 1.0 + 0.1 * jax.random.normal(ks[1], (C2,), jnp.float32)
        be1 = 0.1 * jax.random.normal(ks[2], (C2,), jnp.float32)
        m1 = 0.1 * jax.random.normal(ks[3], (C2,), jnp.float32)
        v1 = jnp.abs(jax.random.normal(ks[4], (C2,), jnp.float32)) + 0.5
        # 3x3 conv: PyTorch weight (C, C2, 3, 3) -> stored HWIO (3, 3, C2, C)
        w2 = jax.random.normal(ks[5], (3, 3, C2, C), jnp.float32) / jnp.sqrt(9 * C2)
        g2 = 1.0 + 0.1 * jax.random.normal(ks[6], (C,), jnp.float32)
        be2 = 0.1 * jax.random.normal(ks[7], (C,), jnp.float32)
        m2 = 0.1 * jax.random.normal(ks[8], (C,), jnp.float32)
        v2 = jnp.abs(jax.random.normal(ks[9], (C,), jnp.float32)) + 0.5
        # fold BN: y = conv * scale + bias
        s1 = (g1 / jnp.sqrt(v1 + eps)).reshape(1, C2)
        b1 = (be1 - m1 * g1 / jnp.sqrt(v1 + eps)).reshape(1, C2)
        s2 = (g2 / jnp.sqrt(v2 + eps)).reshape(1, C)
        b2 = (be2 - m2 * g2 / jnp.sqrt(v2 + eps)).reshape(1, C)
        params.append((w1, s1, b1, w2, s2, b2))
    return params


def residual_block_reference(x, params):
    """Pure-JAX reference (NHWC, bf16 matmul operands, f32 accumulation)."""
    for (w1, s1, b1, w2, s2, b2) in params:
        h = jnp.einsum('nhwc,cd->nhwd', x.astype(jnp.bfloat16),
                       w1.astype(jnp.bfloat16),
                       preferred_element_type=jnp.float32)
        h = h * s1 + b1
        h = h * jax.nn.sigmoid(h)
        h2 = jax.lax.conv_general_dilated(
            h.astype(jnp.bfloat16), w2.astype(jnp.bfloat16),
            window_strides=(1, 1), padding='SAME',
            dimension_numbers=('NHWC', 'HWIO', 'NHWC'),
            preferred_element_type=jnp.float32)
        h2 = h2 * s2 + b2
        h2 = h2 * jax.nn.sigmoid(h2)
        x = x + h2
    return x


if __name__ == "__main__":
    key = jax.random.PRNGKey(0)
    N, H, W, C = 2, 16, 16, 16          # small shapes; C must be even (C//2)
    num_repeat = 2

    kx, kp = jax.random.split(key)
    x = jax.random.normal(kx, (N, H, W, C), jnp.float32)   # layout: NHWC
    params = init_params(kp, C, num_repeat=num_repeat)

    y = residual_block(x, params)
    y = jax.block_until_ready(y)

    y_ref = residual_block_reference(x, params)
    assert y.shape == x.shape
    assert jnp.allclose(y, y_ref, atol=2e-2, rtol=2e-2), "mismatch vs reference"

    print("KERNEL_OK")
</pallas_src>

<mosaic_0001>
module attributes {stable_mosaic.version = 11 : i64} {
  func.func @_residual_block_kernel(%arg0: i32, %arg1: i32, %arg2: memref<1x16x16x16xf32, #tpu.memory_space<vmem>>, %arg3: memref<1x16x8xbf16, #tpu.memory_space<vmem>>, %arg4: memref<1x1x8xf32, #tpu.memory_space<vmem>>, %arg5: memref<1x1x8xf32, #tpu.memory_space<vmem>>, %arg6: memref<1x3x24x16xbf16, #tpu.memory_space<vmem>>, %arg7: memref<1x1x16xf32, #tpu.memory_space<vmem>>, %arg8: memref<1x1x16xf32, #tpu.memory_space<vmem>>, %arg9: memref<1x16x16x16xf32, #tpu.memory_space<vmem>>) attributes {dimension_semantics = [#tpu.dimension_semantics<parallel>, #tpu.dimension_semantics<arbitrary>], iteration_bounds = array<i64: 2, 2>, scalar_prefetch = 0 : i64, scratch_operands = 0 : i64, tpu.core_type = #tpu.core_type<tc>, window_params = [{transform_indices = @transform_0, window_bounds = array<i64: 1, 16, 16, 16>}, {transform_indices = @transform_1, window_bounds = array<i64: 1, 16, 8>}, {transform_indices = @transform_2, window_bounds = array<i64: 1, 1, 8>}, {transform_indices = @transform_3, window_bounds = array<i64: 1, 1, 8>}, {transform_indices = @transform_4, window_bounds = array<i64: 1, 3, 24, 16>}, {transform_indices = @transform_5, window_bounds = array<i64: 1, 1, 16>}, {transform_indices = @transform_6, window_bounds = array<i64: 1, 1, 16>}, {transform_indices = @transform_7, window_bounds = array<i64: 1, 16, 16, 16>}]} {
    %c0_i32 = arith.constant 0 : i32
    %0 = arith.cmpi eq, %arg1, %c0_i32 : i32
    %1 = arith.extui %0 : i1 to i32
    %c0_i32_0 = arith.constant 0 : i32
    %2 = arith.cmpi ne, %1, %c0_i32_0 : i32
    scf.if %2 {
      %c0_34 = arith.constant 0 : index
      %c0_35 = arith.constant 0 : index
      %c0_36 = arith.constant 0 : index
      %c0_37 = arith.constant 0 : index
      %72 = vector.load %arg2[%c0_34, %c0_35, %c0_36, %c0_37] : memref<1x16x16x16xf32, #tpu.memory_space<vmem>>, vector<1x16x16x16xf32>
      %c0_38 = arith.constant 0 : index
      %c0_39 = arith.constant 0 : index
      %c0_40 = arith.constant 0 : index
      %c0_41 = arith.constant 0 : index
      %73 = vector.load %arg9[%c0_38, %c0_39, %c0_40, %c0_41] : memref<1x16x16x16xf32, #tpu.memory_space<vmem>>, vector<1x16x16x16xf32>
      tpu.vector_store %arg9[%c0_38, %c0_39, %c0_40, %c0_41], %72 {strides = array<i32>} : memref<1x16x16x16xf32, #tpu.memory_space<vmem>>, vector<1x16x16x16xf32>,
    } else {
    }
    %c0 = arith.constant 0 : index
    %c0_1 = arith.constant 0 : index
    %c0_2 = arith.constant 0 : index
    %c0_3 = arith.constant 0 : index
    %3 = vector.load %arg9[%c0, %c0_1, %c0_2, %c0_3] : memref<1x16x16x16xf32, #tpu.memory_space<vmem>>, vector<1x16x16x16xf32>
    %4 = vector.shape_cast %3 : vector<1x16x16x16xf32> to vector<16x16x16xf32>
    %5 = vector.shape_cast %4 : vector<16x16x16xf32> to vector<256x16xf32>
    %6 = arith.truncf %5 : vector<256x16xf32> to vector<256x16xbf16>
    %c0_4 = arith.constant 0 : index
    %c0_5 = arith.constant 0 : index
    %c0_6 = arith.constant 0 : index
    %7 = vector.load %arg3[%c0_4, %c0_5, %c0_6] : memref<1x16x8xbf16, #tpu.memory_space<vmem>>, vector<1x16x8xbf16>
    %8 = vector.shape_cast %7 : vector<1x16x8xbf16> to vector<16x8xbf16>
    %cst = arith.constant dense<0.000000e+00> : vector<256x8xf32>
    %9 = tpu.matmul %6, %8, %cst {dimension_numbers = #tpu.dot_dimension_numbers<[1], [0], [0], [1], [0, 0, 1, 1], [], []>} : vector<256x16xbf16>, vector<16x8xbf16>, vector<256x8xf32> -> vector<256x8xf32>
    %c0_7 = arith.constant 0 : index
    %c0_8 = arith.constant 0 : index
    %c0_9 = arith.constant 0 : index
    %10 = vector.load %arg4[%c0_7, %c0_8, %c0_9] : memref<1x1x8xf32, #tpu.memory_space<vmem>>, vector<1x1x8xf32>
    %11 = vector.shape_cast %10 : vector<1x1x8xf32> to vector<1x8xf32>
    %12 = vector.broadcast %11 : vector<1x8xf32> to vector<256x8xf32>
    %13 = arith.mulf %9, %12 : vector<256x8xf32>
    %c0_10 = arith.constant 0 : index
    %c0_11 = arith.constant 0 : index
    %c0_12 = arith.constant 0 : index
    %14 = vector.load %arg5[%c0_10, %c0_11, %c0_12] : memref<1x1x8xf32, #tpu.memory_space<vmem>>, vector<1x1x8xf32>
    %15 = vector.shape_cast %14 : vector<1x1x8xf32> to vector<1x8xf32>
    %16 = vector.broadcast %15 : vector<1x8xf32> to vector<256x8xf32>
    %17 = arith.addf %13, %16 : vector<256x8xf32>
    %18 = arith.negf %17 : vector<256x8xf32>
    %19 = math.exp %18 : vector<256x8xf32>
    %cst_13 = arith.constant 1.000000e+00 : f32
    %20 = vector.broadcast %cst_13 : f32 to vector<256x8xf32>
    %21 = arith.addf %20, %19 : vector<256x8xf32>
    %22 = arith.divf %20, %21 : vector<256x8xf32>
    %23 = arith.mulf %17, %22 : vector<256x8xf32>
    %24 = arith.truncf %23 : vector<256x8xf32> to vector<256x8xbf16>
    %25 = vector.shape_cast %24 : vector<256x8xbf16> to vector<16x16x8xbf16>
    %cst_14 = arith.constant 0.000000e+00 : bf16
    %26 = vector.broadcast %cst_14 : bf16 to vector<16x1x8xbf16>
    %27 = vector.extract_strided_slice %25 {offsets = [0, 0, 0], sizes = [16, 15, 8], strides = [1, 1, 1]} : vector<16x16x8xbf16> to vector<16x15x8xbf16>
    %28 = tpu.concatenate %26, %27 in 1 : vector<16x1x8xbf16>, vector<16x15x8xbf16> -> vector<16x16x8xbf16>
    %29 = vector.extract_strided_slice %25 {offsets = [0, 1, 0], sizes = [16, 15, 8], strides = [1, 1, 1]} : vector<16x16x8xbf16> to vector<16x15x8xbf16>
    %30 = tpu.concatenate %29, %26 in 1 : vector<16x15x8xbf16>, vector<16x1x8xbf16> -> vector<16x16x8xbf16>
    %31 = tpu.concatenate %28, %25, %30 in 2 : vector<16x16x8xbf16>, vector<16x16x8xbf16>, vector<16x16x8xbf16> -> vector<16x16x24xbf16>
    %cst_15 = arith.constant 0.000000e+00 : bf16
    %32 = vector.broadcast %cst_15 : bf16 to vector<1x16x24xbf16>
    %33 = vector.extract_strided_slice %31 {offsets = [0, 0, 0], sizes = [15, 16, 24], strides = [1, 1, 1]} : vector<16x16x24xbf16> to vector<15x16x24xbf16>
    %34 = tpu.concatenate %32, %33 in 0 : vector<1x16x24xbf16>, vector<15x16x24xbf16> -> vector<16x16x24xbf16>
    %35 = vector.extract_strided_slice %31 {offsets = [1, 0, 0], sizes = [15, 16, 24], strides = [1, 1, 1]} : vector<16x16x24xbf16> to vector<15x16x24xbf16>
    %36 = tpu.concatenate %35, %32 in 0 : vector<15x16x24xbf16>, vector<1x16x24xbf16> -> vector<16x16x24xbf16>
    %c0_16 = arith.constant 0 : index
    %c0_17 = arith.constant 0 : index
    %c0_18 = arith.constant 0 : index
    %c0_19 = arith.constant 0 : index
    %37 = vector.load %arg6[%c0_16, %c0_17, %c0_18, %c0_19] : memref<1x3x24x16xbf16, #tpu.memory_space<vmem>>, vector<1x3x24x16xbf16>
    %38 = vector.shape_cast %37 : vector<1x3x24x16xbf16> to vector<3x24x16xbf16>
    %39 = vector.shape_cast %34 : vector<16x16x24xbf16> to vector<256x24xbf16>
    %40 = vector.extract_strided_slice %38 {offsets = [0, 0, 0], sizes = [1, 24, 16], strides = [1, 1, 1]} : vector<3x24x16xbf16> to vector<1x24x16xbf16>
    %41 = vector.shape_cast %40 : vector<1x24x16xbf16> to vector<24x16xbf16>
    %cst_20 = arith.constant dense<0.000000e+00> : vector<256x16xf32>
    %42 = tpu.matmul %39, %41, %cst_20 {dimension_numbers = #tpu.dot_dimension_numbers<[1], [0], [0], [1], [0, 0, 1, 1], [], []>} : vector<256x24xbf16>, vector<24x16xbf16>, vector<256x16xf32> -> vector<256x16xf32>
    %43 = vector.shape_cast %31 : vector<16x16x24xbf16> to vector<256x24xbf16>
    %44 = vector.extract_strided_slice %38 {offsets = [1, 0, 0], sizes = [1, 24, 16], strides = [1, 1, 1]} : vector<3x24x16xbf16> to vector<1x24x16xbf16>
    %45 = vector.shape_cast %44 : vector<1x24x16xbf16> to vector<24x16xbf16>
    %cst_21 = arith.constant dense<0.000000e+00> : vector<256x16xf32>
    %46 = tpu.matmul %43, %45, %cst_21 {dimension_numbers = #tpu.dot_dimension_numbers<[1], [0], [0], [1], [0, 0, 1, 1], [], []>} : vector<256x24xbf16>, vector<24x16xbf16>, vector<256x16xf32> -> vector<256x16xf32>
    %47 = arith.addf %42, %46 : vector<256x16xf32>
    %48 = vector.shape_cast %36 : vector<16x16x24xbf16> to vector<256x24xbf16>
    %49 = vector.extract_strided_slice %38 {offsets = [2, 0, 0], sizes = [1, 24, 16], strides = [1, 1, 1]} : vector<3x24x16xbf16> to vector<1x24x16xbf16>
    %50 = vector.shape_cast %49 : vector<1x24x16xbf16> to vector<24x16xbf16>
    %cst_22 = arith.constant dense<0.000000e+00> : vector<256x16xf32>
    %51 = tpu.matmul %48, %50, %cst_22 {dimension_numbers = #tpu.dot_dimension_numbers<[1], [0], [0], [1], [0, 0, 1, 1], [], []>} : vector<256x24xbf16>, vector<24x16xbf16>, vector<256x16xf32> -> vector<256x16xf32>
    %52 = arith.addf %47, %51 : vector<256x16xf32>
    %c0_23 = arith.constant 0 : index
    %c0_24 = arith.constant 0 : index
    %c0_25 = arith.constant 0 : index
    %53 = vector.load %arg7[%c0_23, %c0_24, %c0_25] : memref<1x1x16xf32, #tpu.memory_space<vmem>>, vector<1x1x16xf32>
    %54 = vector.shape_cast %53 : vector<1x1x16xf32> to vector<1x16xf32>
    %55 = vector.broadcast %54 : vector<1x16xf32> to vector<256x16xf32>
    %56 = arith.mulf %52, %55 : vector<256x16xf32>
    %c0_26 = arith.constant 0 : index
    %c0_27 = arith.constant 0 : index
    %c0_28 = arith.constant 0 : index
    %57 = vector.load %arg8[%c0_26, %c0_27, %c0_28] : memref<1x1x16xf32, #tpu.memory_space<vmem>>, vector<1x1x16xf32>
    %58 = vector.shape_cast %57 : vector<1x1x16xf32> to vector<1x16xf32>
    %59 = vector.broadcast %58 : vector<1x16xf32> to vector<256x16xf32>
    %60 = arith.addf %56, %59 : vector<256x16xf32>
    %61 = arith.negf %60 : vector<256x16xf32>
    %62 = math.exp %61 : vector<256x16xf32>
    %cst_29 = arith.constant 1.000000e+00 : f32
    %63 = vector.broadcast %cst_29 : f32 to vector<256x16xf32>
    %64 = arith.addf %63, %62 : vector<256x16xf32>
    %65 = arith.divf %63, %64 : vector<256x16xf32>
    %66 = arith.mulf %60, %65 : vector<256x16xf32>
    %67 = arith.addf %5, %66 : vector<256x16xf32>
    %68 = vector.shape_cast %67 : vector<256x16xf32> to vector<16x16x16xf32>
    %c0_30 = arith.constant 0 : index
    %c0_31 = arith.constant 0 : index
    %c0_32 = arith.constant 0 : index
    %c0_33 = arith.constant 0 : index
    %69 = vector.load %arg9[%c0_30, %c0_31, %c0_32, %c0_33] : memref<1x16x16x16xf32, #tpu.memory_space<vmem>>, vector<1x16x16x16xf32>
    %70 = vector.shape_cast %69 : vector<1x16x16x16xf32> to vector<16x16x16xf32>
    %71 = vector.shape_cast %68 : vector<16x16x16xf32> to vector<1x16x16x16xf32>
    tpu.vector_store %arg9[%c0_30, %c0_31, %c0_32, %c0_33], %71 {strides = array<i32>} : memref<1x16x16x16xf32, #tpu.memory_space<vmem>>, vector<1x16x16x16xf32>,
    return
  }
  func.func @transform_0(%arg0: i32, %arg1: i32) -> (i32, i32, i32, i32) {
    %c0_i32 = arith.constant 0 : i32
    %c0_i32_0 = arith.constant 0 : i32
    %c0_i32_1 = arith.constant 0 : i32
    %c0_i32_2 = arith.constant 0 : i32
    return %arg0, %c0_i32, %c0_i32_0, %c0_i32_1 : i32, i32, i32, i32
  }
  func.func @transform_1(%arg0: i32, %arg1: i32) -> (i32, i32, i32) {
    %c0_i32 = arith.constant 0 : i32
    %c0_i32_0 = arith.constant 0 : i32
    %c0_i32_1 = arith.constant 0 : i32
    return %arg1, %c0_i32, %c0_i32_0 : i32, i32, i32
  }
  func.func @transform_2(%arg0: i32, %arg1: i32) -> (i32, i32, i32) {
    %c0_i32 = arith.constant 0 : i32
    %c0_i32_0 = arith.constant 0 : i32
    %c0_i32_1 = arith.constant 0 : i32
    return %arg1, %c0_i32, %c0_i32_0 : i32, i32, i32
  }
  func.func @transform_3(%arg0: i32, %arg1: i32) -> (i32, i32, i32) {
    %c0_i32 = arith.constant 0 : i32
    %c0_i32_0 = arith.constant 0 : i32
    %c0_i32_1 = arith.constant 0 : i32
    return %arg1, %c0_i32, %c0_i32_0 : i32, i32, i32
  }
  func.func @transform_4(%arg0: i32, %arg1: i32) -> (i32, i32, i32, i32) {
    %c0_i32 = arith.constant 0 : i32
    %c0_i32_0 = arith.constant 0 : i32
    %c0_i32_1 = arith.constant 0 : i32
    %c0_i32_2 = arith.constant 0 : i32
    return %arg1, %c0_i32, %c0_i32_0, %c0_i32_1 : i32, i32, i32, i32
  }
  func.func @transform_5(%arg0: i32, %arg1: i32) -> (i32, i32, i32) {
    %c0_i32 = arith.constant 0 : i32
    %c0_i32_0 = arith.constant 0 : i32
    %c0_i32_1 = arith.constant 0 : i32
    return %arg1, %c0_i32, %c0_i32_0 : i32, i32, i32
  }
  func.func @transform_6(%arg0: i32, %arg1: i32) -> (i32, i32, i32) {
    %c0_i32 = arith.constant 0 : i32
    %c0_i32_0 = arith.constant 0 : i32
    %c0_i32_1 = arith.constant 0 : i32
    return %arg1, %c0_i32, %c0_i32_0 : i32, i32, i32
  }
  func.func @transform_7(%arg0: i32, %arg1: i32) -> (i32, i32, i32, i32) {
    %c0_i32 = arith.constant 0 : i32
    %c0_i32_0 = arith.constant 0 : i32
    %c0_i32_1 = arith.constant 0 : i32
    %c0_i32_2 = arith.constant 0 : i32
    return %arg0, %c0_i32, %c0_i32_0, %c0_i32_1 : i32, i32, i32, i32
  }
}

</mosaic_0001>

<llo_original>
// kernel: tpu_custom_call.1
$region0: #{tpu_custom_call.1}
  #allocation0 [shape = 'u32[]', space=smem, size = 0x4, offset = 0x4, fixed_abs, tag = 'smem constant byte address 0x4 - core index']
  #allocation1 [shape = 'u32[144,128]{1,0:T(1,128)}', space=vmem, size = 0x12000, scoped, tag = 'internal scratch']
  %s0 = inlined_call_operand.hbm [shape: f32[2,16,16,16], index: 0, kind: input, shape index: {}]
  %s1 = inlined_call_operand.vmem [shape: bf16[2,16,8], index: 1, kind: input, shape index: {}]
  %s2 = inlined_call_operand.vmem [shape: f32[2,1,8], index: 2, kind: input, shape index: {}]
  %s3 = inlined_call_operand.vmem [shape: f32[2,1,8], index: 3, kind: input, shape index: {}]
  %s4 = inlined_call_operand.vmem [shape: bf16[2,3,24,16], index: 4, kind: input, shape index: {}]
  %s5 = inlined_call_operand.vmem [shape: f32[2,1,16], index: 5, kind: input, shape index: {}]
  %s6 = inlined_call_operand.vmem [shape: f32[2,1,16], index: 6, kind: input, shape index: {}]
  %s7 = inlined_call_operand.hbm [shape: f32[2,16,16,16], index: 7, kind: output, shape index: {}]
  %s8 = sld [smem:[#allocation0]]
  $region69: #{tpu_custom_call.1} parent=0
    _
  %s10 = ssub.s32 1, %s8
  %s11 = scalar_select 0, %s10, %s8
  $region1: #{tpu_custom_call.1} parent=0
    #allocation2 [shape = 'u8[262144]{0}', space=vmem, size = 0x40000, scoped, tag = 'input window, operand 0']
    #allocation3 [shape = 's32[2]{0}', space=sflag, size = 0x8, scoped, tag = 'scoped memory for tpu_custom_call.1']
    #allocation4 [shape = 's32[2]{0}', space=sflag, size = 0x8, scoped, tag = 'scoped memory for tpu_custom_call.1']
    #allocation5 [shape = 'u8[262144]{0}', space=vmem, size = 0x40000, scoped, tag = 'output window, operand 0']
    %12 = vsyncpa [#allocation3], 0
    %s13 = scalar_lea.sflag [#allocation3], 1
    %14 = vsyncpa %s13, 0
    %15 = vsyncpa [#allocation4], 0
    %s16 = scalar_lea.sflag [#allocation4], 1
    %17 = vsyncpa %s16, 0
    loop: start=0, step=1, limit=6
    $region2: #{tpu_custom_call.1} parent=1 // loop_pre_header
      _
    $region3: #{tpu_custom_call.1} parent=1 // loop_header
      %s19 = sphi 0, %s23
      %p20 = scmp.ge.s32.totalorder %s19, 6
      %s26 = sphi 0, %s38
      %s27 = sphi 0, %s34
      %s28 = sphi 0, %s26
      %s29 = sphi 0, %s27
      %s30 = sphi 0, %s28
      %s31 = sphi 0, %s29
      %s41 = sphi 0, %s43
      %s44 = sphi 0, %s41
      %s45 = sphi 0, %s44
      %s61 = sphi 0, %s45
      %s67 = sphi 0, %s69
      %s70 = sphi 0, %s67
      %s71 = sphi 0, %s70
      %s87 = sphi 0, %s71
      %s93 = sphi 0, %s95
      %s96 = sphi 0, %s93
      %s97 = sphi 0, %s96
      %s113 = sphi 0, %s97
      %s119 = sphi 0, %s121
      %s122 = sphi 0, %s119
      %s123 = sphi 0, %s122
      %s139 = sphi 0, %s123
      %s145 = sphi 0, %s147
      %s148 = sphi 0, %s145
      %s149 = sphi 0, %s148
      %s165 = sphi 0, %s149
      %s171 = sphi 0, %s173
      %s174 = sphi 0, %s171
      %s175 = sphi 0, %s174
      %s191 = sphi 0, %s175
      %s197 = sphi 0, %s199
      %s200 = sphi 0, %s197
      %s201 = sphi 0, %s200
      %s217 = sphi 0, %s201
      %s223 = sphi 0, %s225
      %s226 = sphi 0, %s223
      %s227 = sphi 0, %s226
      %s243 = sphi 0, %s227
    $region4: #{tpu_custom_call.1} parent=1 // loop_header_branch
      %22 = sbr.rel (%p20) target = $region8
    $region5: #{tpu_custom_call.1} parent=1 // loop_body
      %s24 = ssub.s32 %s19, 1
      %s25 = ssub.s32 %s19, 2
      %s32 = sadd.s32 1, %s27
      %p33 = scmp.ge.s32.totalorder %s32, 2
      %s34 = scalar_select %p33, 0, %s32
      %s35 = sadd.s32 1, %s26
      %s36 = scalar_select %p33, %s35, %s26
      %p37 = scmp.ge.s32.totalorder %s36, 2
      %s38 = scalar_select %p37, 0, %s36
      %s39 = ssub.s32 %s26, %s38
      %p40 = scmp.eq.s32.totalorder %s39, 0
      %s42 = sadd.s32 %s41, 1
      %s43 = scalar_select %p40, %s41, %s42
      %p46 = pneg %p40
      %p47 = scmp.eq.s32.totalorder %s19, 3
      %p48 = por %p46, %p47
      %p49 = scmp.ne.s32.totalorder %s41, %s44
      %p50 = scmp.eq.s32.totalorder %s19, 0
      %p51 = por %p49, %p50
      %p52 = scmp.ne.s32.totalorder %s41, %s44
      %p53 = scmp.eq.s32.totalorder %s24, 3
      %p54 = por %p52, %p53
      %p55 = scmp.ne.s32.totalorder %s44, %s45
      %p56 = scmp.eq.s32.totalorder %s24, 0
      %p57 = por %p55, %p56
      %p58 = scmp.ne.s32.totalorder %s44, %s45
      %p59 = scmp.eq.s32.totalorder %s25, 3
      %p60 = por %p58, %p59
      %p62 = scmp.ne.s32.totalorder %s45, %s61
      %p63 = scmp.eq.s32.totalorder %s25, 0
      %p64 = por %p62, %p63
      %s65 = ssub.s32 %s27, %s34
      %p66 = scmp.eq.s32.totalorder %s65, 0
      %s68 = sadd.s32 %s67, 1
      %s69 = scalar_select %p66, %s67, %s68
      %p72 = pneg %p66
      %p73 = scmp.eq.s32.totalorder %s19, 3
      %p74 = por %p72, %p73
      %p75 = scmp.ne.s32.totalorder %s67, %s70
      %p76 = scmp.eq.s32.totalorder %s19, 0
      %p77 = por %p75, %p76
      %p78 = scmp.ne.s32.totalorder %s67, %s70
      %p79 = scmp.eq.s32.totalorder %s24, 3
      %p80 = por %p78, %p79
      %p81 = scmp.ne.s32.totalorder %s70, %s71
      %p82 = scmp.eq.s32.totalorder %s24, 0
      %p83 = por %p81, %p82
      %p84 = scmp.ne.s32.totalorder %s70, %s71
      %p85 = scmp.eq.s32.totalorder %s25, 3
      %p86 = por %p84, %p85
      %p88 = scmp.ne.s32.totalorder %s71, %s87
      %p89 = scmp.eq.s32.totalorder %s25, 0
      %p90 = por %p88, %p89
      %s91 = ssub.s32 %s27, %s34
      %p92 = scmp.eq.s32.totalorder %s91, 0
      %s94 = sadd.s32 %s93, 1
      %s95 = scalar_select %p92, %s93, %s94
      %p98 = pneg %p92
      %p99 = scmp.eq.s32.totalorder %s19, 3
      %p100 = por %p98, %p99
      %p101 = scmp.ne.s32.totalorder %s93, %s96
      %p102 = scmp.eq.s32.totalorder %s19, 0
      %p103 = por %p101, %p102
      %p104 = scmp.ne.s32.totalorder %s93, %s96
      %p105 = scmp.eq.s32.totalorder %s24, 3
      %p106 = por %p104, %p105
      %p107 = scmp.ne.s32.totalorder %s96, %s97
      %p108 = scmp.eq.s32.totalorder %s24, 0
      %p109 = por %p107, %p108
      %p110 = scmp.ne.s32.totalorder %s96, %s97
      %p111 = scmp.eq.s32.totalorder %s25, 3
      %p112 = por %p110, %p111
      %p114 = scmp.ne.s32.totalorder %s97, %s113
      %p115 = scmp.eq.s32.totalorder %s25, 0
      %p116 = por %p114, %p115
      %s117 = ssub.s32 %s27, %s34
      %p118 = scmp.eq.s32.totalorder %s117, 0
      %s120 = sadd.s32 %s119, 1
      %s121 = scalar_select %p118, %s119, %s120
      %p124 = pneg %p118
      %p125 = scmp.eq.s32.totalorder %s19, 3
      %p126 = por %p124, %p125
      %p127 = scmp.ne.s32.totalorder %s119, %s122
      %p128 = scmp.eq.s32.totalorder %s19, 0
      %p129 = por %p127, %p128
      %p130 = scmp.ne.s32.totalorder %s119, %s122
      %p131 = scmp.eq.s32.totalorder %s24, 3
      %p132 = por %p130, %p131
      %p133 = scmp.ne.s32.totalorder %s122, %s123
      %p134 = scmp.eq.s32.totalorder %s24, 0
      %p135 = por %p133, %p134
      %p136 = scmp.ne.s32.totalorder %s122, %s123
      %p137 = scmp.eq.s32.totalorder %s25, 3
      %p138 = por %p136, %p137
      %p140 = scmp.ne.s32.totalorder %s123, %s139
      %p141 = scmp.eq.s32.totalorder %s25, 0
      %p142 = por %p140, %p141
      %s143 = ssub.s32 %s27, %s34
      %p144 = scmp.eq.s32.totalorder %s143, 0
      %s146 = sadd.s32 %s145, 1
      %s147 = scalar_select %p144, %s145, %s146
      %p150 = pneg %p144
      %p151 = scmp.eq.s32.totalorder %s19, 3
      %p152 = por %p150, %p151
      %p153 = scmp.ne.s32.totalorder %s145, %s148
      %p154 = scmp.eq.s32.totalorder %s19, 0
      %p155 = por %p153, %p154
      %p156 = scmp.ne.s32.totalorder %s145, %s148
      %p157 = scmp.eq.s32.totalorder %s24, 3
      %p158 = por %p156, %p157
      %p159 = scmp.ne.s32.totalorder %s148, %s149
      %p160 = scmp.eq.s32.totalorder %s24, 0
      %p161 = por %p159, %p160
      %p162 = scmp.ne.s32.totalorder %s148, %s149
      %p163 = scmp.eq.s32.totalorder %s25, 3
      %p164 = por %p162, %p163
      %p166 = scmp.ne.s32.totalorder %s149, %s165
      %p167 = scmp.eq.s32.totalorder %s25, 0
      %p168 = por %p166, %p167
      %s169 = ssub.s32 %s27, %s34
      %p170 = scmp.eq.s32.totalorder %s169, 0
      %s172 = sadd.s32 %s171, 1
      %s173 = scalar_select %p170, %s171, %s172
      %p176 = pneg %p170
      %p177 = scmp.eq.s32.totalorder %s19, 3
      %p178 = por %p176, %p177
      %p179 = scmp.ne.s32.totalorder %s171, %s174
      %p180 = scmp.eq.s32.totalorder %s19, 0
      %p181 = por %p179, %p180
      %p182 = scmp.ne.s32.totalorder %s171, %s174
      %p183 = scmp.eq.s32.totalorder %s24, 3
      %p184 = por %p182, %p183
      %p185 = scmp.ne.s32.totalorder %s174, %s175
      %p186 = scmp.eq.s32.totalorder %s24, 0
      %p187 = por %p185, %p186
      %p188 = scmp.ne.s32.totalorder %s174, %s175
      %p189 = scmp.eq.s32.totalorder %s25, 3
      %p190 = por %p188, %p189
      %p192 = scmp.ne.s32.totalorder %s175, %s191
      %p193 = scmp.eq.s32.totalorder %s25, 0
      %p194 = por %p192, %p193
      %s195 = ssub.s32 %s27, %s34
      %p196 = scmp.eq.s32.totalorder %s195, 0
      %s198 = sadd.s32 %s197, 1
      %s199 = scalar_select %p196, %s197, %s198
      %p202 = pneg %p196
      %p203 = scmp.eq.s32.totalorder %s19, 3
      %p204 = por %p202, %p203
      %p205 = scmp.ne.s32.totalorder %s197, %s200
      %p206 = scmp.eq.s32.totalorder %s19, 0
      %p207 = por %p205, %p206
      %p208 = scmp.ne.s32.totalorder %s197, %s200
      %p209 = scmp.eq.s32.totalorder %s24, 3
      %p210 = por %p208, %p209
      %p211 = scmp.ne.s32.totalorder %s200, %s201
      %p212 = scmp.eq.s32.totalorder %s24, 0
      %p213 = por %p211, %p212
      %p214 = scmp.ne.s32.totalorder %s200, %s201
      %p215 = scmp.eq.s32.totalorder %s25, 3
      %p216 = por %p214, %p215
      %p218 = scmp.ne.s32.totalorder %s201, %s217
      %p219 = scmp.eq.s32.totalorder %s25, 0
      %p220 = por %p218, %p219
      %s221 = ssub.s32 %s26, %s38
      %p222 = scmp.eq.s32.totalorder %s221, 0
      %s224 = sadd.s32 %s223, 1
      %s225 = scalar_select %p222, %s223, %s224
      %p228 = pneg %p222
      %p229 = scmp.eq.s32.totalorder %s19, 3
      %p230 = por %p228, %p229
      %p231 = scmp.ne.s32.totalorder %s223, %s226
      %p232 = scmp.eq.s32.totalorder %s19, 0
      %p233 = por %p231, %p232
      %p234 = scmp.ne.s32.totalorder %s223, %s226
      %p235 = scmp.eq.s32.totalorder %s24, 3
      %p236 = por %p234, %p235
      %p237 = scmp.ne.s32.totalorder %s226, %s227
      %p238 = scmp.eq.s32.totalorder %s24, 0
      %p239 = por %p237, %p238
      %p240 = scmp.ne.s32.totalorder %s226, %s227
      %p241 = scmp.eq.s32.totalorder %s25, 3
      %p242 = por %p240, %p241
      %p244 = scmp.ne.s32.totalorder %s227, %s243
      %p245 = scmp.eq.s32.totalorder %s25, 0
      %p246 = por %p244, %p245
      %p247 = scmp.le.s32.totalorder 1, %s19
      %p248 = scmp.lt.s32.totalorder %s19, 5
      %p249 = pnand %p247, %p248
      %p250 = pneg %p249
      // Predicated region
      $region9: #{tpu_custom_call.1} parent=5 // pred_check
        _
      $region10: #{tpu_custom_call.1} parent=5 // pred_check_branch
        %252 = sbr.rel (%p249) target = $region12
      $region11: #{tpu_custom_call.1} parent=5 // pred_region
        %s253 = ssub.s32 %s19, 1
      $region12: #{tpu_custom_call.1} parent=5 // pred_fallthru
        _
      %p254 = scmp.lt.s32.totalorder %s19, 4
      // Predicated region
      $region13: #{tpu_custom_call.1} parent=5 // pred_check
        %p255 = pneg %p254
      $region14: #{tpu_custom_call.1} parent=5 // pred_check_branch
        %257 = sbr.rel (%p255) target = $region16
      $region15: #{tpu_custom_call.1} parent=5 // pred_region
        // Predicated region
        $region17: #{tpu_custom_call.1} parent=15 // pred_check
          %p258 = pneg %p51
        $region18: #{tpu_custom_call.1} parent=15 // pred_check_branch
          %260 = sbr.rel (%p258) target = $region20
        $region19: #{tpu_custom_call.1} parent=15 // pred_region
          %s261 = sand.u32 %s41, 1
          %s262 = scalar_lea.sflag [#allocation3], %s261
          %s263 = sand.u32 %s41, 1
          %s264 = smul.addr %s263, 256
          %s265 = scalar_lea.vmem [#allocation2], %s264
          %s267 = ssub.s32 4096, 4096
          %268 = vsyncadd %s262, %s267
          %s269 = smul.addr %s26, 32
          %s270 = smul.addr %s269, 128
          %s271 = scalar_lea.hbm %s0, %s270
          %s272 = sshll.u32 %s265, 4
          %s273 = int_to_ptr.vmem [resolvable:$true] %s272
          %278 = dma.hbm_to_vmem [thread:$0]  %s271, 4096, %s273, %s262, 128, 128, 8
        $region20: #{tpu_custom_call.1} parent=15 // pred_fallthru
          _
        // Predicated region
        $region21: #{tpu_custom_call.1} parent=15 // pred_check
          %p279 = pneg %p77
        $region22: #{tpu_custom_call.1} parent=15 // pred_check_branch
          %281 = sbr.rel (%p279) target = $region24
        $region23: #{tpu_custom_call.1} parent=15 // pred_region
          %p282 = scmp.lt.s32.totalorder %s27, 1
          %s283 = scalar_select %p282, %s27, 1
          %s284 = smul.addr %s283, 2
          %s285 = smul.addr %s284, 4
          %s286 = scalar_lea.vmem %s1, %s285
        $region24: #{tpu_custom_call.1} parent=15 // pred_fallthru
          _
        // Predicated region
        $region25: #{tpu_custom_call.1} parent=15 // pred_check
          %p287 = pneg %p103
        $region26: #{tpu_custom_call.1} parent=15 // pred_check_branch
          %289 = sbr.rel (%p287) target = $region28
        $region27: #{tpu_custom_call.1} parent=15 // pred_region
          %p290 = scmp.lt.s32.totalorder %s27, 1
          %s291 = scalar_select %p290, %s27, 1
          %s292 = scalar_lea.vmem %s2, %s291
        $region28: #{tpu_custom_call.1} parent=15 // pred_fallthru
          _
        // Predicated region
        $region29: #{tpu_custom_call.1} parent=15 // pred_check
          %p293 = pneg %p129
        $region30: #{tpu_custom_call.1} parent=15 // pred_check_branch
          %295 = sbr.rel (%p293) target = $region32
        $region31: #{tpu_custom_call.1} parent=15 // pred_region
          %p296 = scmp.lt.s32.totalorder %s27, 1
          %s297 = scalar_select %p296, %s27, 1
          %s298 = scalar_lea.vmem %s3, %s297
        $region32: #{tpu_custom_call.1} parent=15 // pred_fallthru
          _
        // Predicated region
        $region33: #{tpu_custom_call.1} parent=15 // pred_check
          %p299 = pneg %p155
        $region34: #{tpu_custom_call.1} parent=15 // pred_check_branch
          %301 = sbr.rel (%p299) target = $region36
        $region35: #{tpu_custom_call.1} parent=15 // pred_region
          %p302 = scmp.lt.s32.totalorder %s27, 1
          %s303 = scalar_select %p302, %s27, 1
          %s304 = smul.addr %s303, 9
          %s305 = smul.addr %s304, 4
          %s306 = scalar_lea.vmem %s4, %s305
        $region36: #{tpu_custom_call.1} parent=15 // pred_fallthru
          _
        // Predicated region
        $region37: #{tpu_custom_call.1} parent=15 // pred_check
          %p307 = pneg %p181
        $region38: #{tpu_custom_call.1} parent=15 // pred_check_branch
          %309 = sbr.rel (%p307) target = $region40
        $region39: #{tpu_custom_call.1} parent=15 // pred_region
          %p310 = scmp.lt.s32.totalorder %s27, 1
          %s311 = scalar_select %p310, %s27, 1
          %s312 = scalar_lea.vmem %s5, %s311
        $region40: #{tpu_custom_call.1} parent=15 // pred_fallthru
          _
        // Predicated region
        $region41: #{tpu_custom_call.1} parent=15 // pred_check
          %p313 = pneg %p207
        $region42: #{tpu_custom_call.1} parent=15 // pred_check_branch
          %315 = sbr.rel (%p313) target = $region44
        $region43: #{tpu_custom_call.1} parent=15 // pred_region
          %p316 = scmp.lt.s32.totalorder %s27, 1
          %s317 = scalar_select %p316, %s27, 1
          %s318 = scalar_lea.vmem %s6, %s317
        $region44: #{tpu_custom_call.1} parent=15 // pred_fallthru
          _
      $region16: #{tpu_custom_call.1} parent=5 // pred_fallthru
        _
      %p319 = scmp.le.s32.totalorder 1, %s19
      %p320 = scmp.lt.s32.totalorder %s19, 5
      %p321 = pnand %p319, %p320
      %p322 = pneg %p321
      // Predicated region
      $region45: #{tpu_custom_call.1} parent=5 // pred_check
        _
      $region46: #{tpu_custom_call.1} parent=5 // pred_check_branch
        %324 = sbr.rel (%p321) target = $region48
      $region47: #{tpu_custom_call.1} parent=5 // pred_region
        %s325 = ssub.s32 %s19, 1
        %s326 = sand.u32 %s44, 1
        %s327 = scalar_lea.sflag [#allocation3], %s326
        %s328 = sand.u32 %s44, 1
        %s329 = smul.addr %s328, 256
        %s330 = scalar_lea.vmem [#allocation2], %s329
        // Predicated region
        $region49: #{tpu_custom_call.1} parent=47 // pred_check
          %p331 = pneg %p57
        $region50: #{tpu_custom_call.1} parent=47 // pred_check_branch
          %333 = sbr.rel (%p331) target = $region52
        $region51: #{tpu_custom_call.1} parent=47 // pred_region
          %334 = dma.done %s327, 4096
        $region52: #{tpu_custom_call.1} parent=47 // pred_fallthru
          _
        %s335 = sand.u32 %s44, 1
        %s336 = scalar_lea.sflag [#allocation3], %s335
        %s337 = sand.u32 %s44, 1
        %s338 = smul.addr %s337, 256
        %s339 = scalar_lea.vmem [#allocation2], %s338
        %p340 = pneg %p57
        %p341 = pneg %p54
        %p342 = scmp.lt.s32.totalorder %s29, 1
        %s343 = scalar_select %p342, %s29, 1
        %s344 = smul.addr %s343, 2
        %s345 = smul.addr %s344, 4
        %s346 = scalar_lea.vmem %s1, %s345
        %p347 = pneg %p83
        %p348 = pneg %p80
        %p349 = scmp.lt.s32.totalorder %s29, 1
        %s350 = scalar_select %p349, %s29, 1
        %s351 = scalar_lea.vmem %s2, %s350
        %p352 = pneg %p109
        %p353 = pneg %p106
        %p354 = scmp.lt.s32.totalorder %s29, 1
        %s355 = scalar_select %p354, %s29, 1
        %s356 = scalar_lea.vmem %s3, %s355
        %p357 = pneg %p135
        %p358 = pneg %p132
        %p359 = scmp.lt.s32.totalorder %s29, 1
        %s360 = scalar_select %p359, %s29, 1
        %s361 = smul.addr %s360, 9
        %s362 = smul.addr %s361, 4
        %s363 = scalar_lea.vmem %s4, %s362
        %p364 = pneg %p161
        %p365 = pneg %p158
        %p366 = scmp.lt.s32.totalorder %s29, 1
        %s367 = scalar_select %p366, %s29, 1
        %s368 = scalar_lea.vmem %s5, %s367
        %p369 = pneg %p187
        %p370 = pneg %p184
        %p371 = scmp.lt.s32.totalorder %s29, 1
        %s372 = scalar_select %p371, %s29, 1
        %s373 = scalar_lea.vmem %s6, %s372
        %p374 = pneg %p213
        %p375 = pneg %p210
        %p376 = pneg %p239
        %p377 = pneg %p236
        %s378 = sand.u32 %s226, 1
        %s379 = scalar_lea.sflag [#allocation4], %s378
        %s380 = sand.u32 %s226, 1
        %s381 = smul.addr %s380, 256
        %s382 = scalar_lea.vmem [#allocation5], %s381
        %p383 = scmp.lt.s32.totalorder %s29, 1
        %s384 = scalar_select %p383, %s29, 1
        %s385 = smul.addr %s384, 2
        %s386 = smul.addr %s385, 4
        %s387 = scalar_lea.vmem %s1, %s386
        %p388 = scmp.lt.s32.totalorder %s29, 1
        %s389 = scalar_select %p388, %s29, 1
        %s390 = scalar_lea.vmem %s2, %s389
        %p391 = scmp.lt.s32.totalorder %s29, 1
        %s392 = scalar_select %p391, %s29, 1
        %s393 = scalar_lea.vmem %s3, %s392
        %p394 = scmp.lt.s32.totalorder %s29, 1
        %s395 = scalar_select %p394, %s29, 1
        %s396 = smul.addr %s395, 9
        %s397 = smul.addr %s396, 4
        %s398 = scalar_lea.vmem %s4, %s397
        %p399 = scmp.lt.s32.totalorder %s29, 1
        %s400 = scalar_select %p399, %s29, 1
        %s401 = scalar_lea.vmem %s5, %s400
        %p402 = scmp.lt.s32.totalorder %s29, 1
        %s403 = scalar_select %p402, %s29, 1
        %s404 = scalar_lea.vmem %s6, %s403
        %p406 = scmp.eq.s32.totalorder %s29, 0
        // Predicated region
        $region53: #{tpu_custom_call.1} parent=47 // pred_check
          %p407 = pneg %p406
        $region54: #{tpu_custom_call.1} parent=47 // pred_check_branch
          %409 = sbr.rel (%p407) target = $region56
        $region55: #{tpu_custom_call.1} parent=47 // pred_region
          %v410 = vld [vmem:[%s330] sm:$0xff]
          %v411 = vld [vmem:[%s330 + $0x8] sm:$0xff]
          %v412 = vld [vmem:[%s330 + $0x10] sm:$0xff]
          %v413 = vld [vmem:[%s330 + $0x18] sm:$0xff]
          %v414 = vld [vmem:[%s330 + $0x20] sm:$0xff]
          %v415 = vld [vmem:[%s330 + $0x28] sm:$0xff]
          %v416 = vld [vmem:[%s330 + $0x30] sm:$0xff]
          %v417 = vld [vmem:[%s330 + $0x38] sm:$0xff]
          %v418 = vld [vmem:[%s330 + $0x40] sm:$0xff]
          %v419 = vld [vmem:[%s330 + $0x48] sm:$0xff]
          %v420 = vld [vmem:[%s330 + $0x50] sm:$0xff]
          %v421 = vld [vmem:[%s330 + $0x58] sm:$0xff]
          %v422 = vld [vmem:[%s330 + $0x60] sm:$0xff]
          %v423 = vld [vmem:[%s330 + $0x68] sm:$0xff]
          %v424 = vld [vmem:[%s330 + $0x70] sm:$0xff]
          %v425 = vld [vmem:[%s330 + $0x78] sm:$0xff]
          %v426 = vld [vmem:[%s330 + $0x80] sm:$0xff]
          %v427 = vld [vmem:[%s330 + $0x88] sm:$0xff]
          %v428 = vld [vmem:[%s330 + $0x90] sm:$0xff]
          %v429 = vld [vmem:[%s330 + $0x98] sm:$0xff]
          %v430 = vld [vmem:[%s330 + $0xa0] sm:$0xff]
          %v431 = vld [vmem:[%s330 + $0xa8] sm:$0xff]
          %v432 = vld [vmem:[%s330 + $0xb0] sm:$0xff]
          %v433 = vld [vmem:[%s330 + $0xb8] sm:$0xff]
          %v434 = vld [vmem:[%s330 + $0xc0] sm:$0xff]
          %v435 = vld [vmem:[%s330 + $0xc8] sm:$0xff]
          %v436 = vld [vmem:[%s330 + $0xd0] sm:$0xff]
          %v437 = vld [vmem:[%s330 + $0xd8] sm:$0xff]
          %v438 = vld [vmem:[%s330 + $0xe0] sm:$0xff]
          %v439 = vld [vmem:[%s330 + $0xe8] sm:$0xff]
          %v440 = vld [vmem:[%s330 + $0xf0] sm:$0xff]
          %v441 = vld [vmem:[%s330 + $0xf8] sm:$0xff]
          %vm442 = vcmask 130048
          %443 = vst.msk [vmem:[%s382] sm:$0xff] %vm442, %v410
          %444 = vst.msk [vmem:[%s382 + $0x8] sm:$0xff] %vm442, %v411
          %445 = vst.msk [vmem:[%s382 + $0x10] sm:$0xff] %vm442, %v412
          %446 = vst.msk [vmem:[%s382 + $0x18] sm:$0xff] %vm442, %v413
          %447 = vst.msk [vmem:[%s382 + $0x20] sm:$0xff] %vm442, %v414
          %448 = vst.msk [vmem:[%s382 + $0x28] sm:$0xff] %vm442, %v415
          %449 = vst.msk [vmem:[%s382 + $0x30] sm:$0xff] %vm442, %v416
          %450 = vst.msk [vmem:[%s382 + $0x38] sm:$0xff] %vm442, %v417
          %451 = vst.msk [vmem:[%s382 + $0x40] sm:$0xff] %vm442, %v418
          %452 = vst.msk [vmem:[%s382 + $0x48] sm:$0xff] %vm442, %v419
          %453 = vst.msk [vmem:[%s382 + $0x50] sm:$0xff] %vm442, %v420
          %454 = vst.msk [vmem:[%s382 + $0x58] sm:$0xff] %vm442, %v421
          %455 = vst.msk [vmem:[%s382 + $0x60] sm:$0xff] %vm442, %v422
          %456 = vst.msk [vmem:[%s382 + $0x68] sm:$0xff] %vm442, %v423
          %457 = vst.msk [vmem:[%s382 + $0x70] sm:$0xff] %vm442, %v424
          %458 = vst.msk [vmem:[%s382 + $0x78] sm:$0xff] %vm442, %v425
          %459 = vst.msk [vmem:[%s382 + $0x80] sm:$0xff] %vm442, %v426
          %460 = vst.msk [vmem:[%s382 + $0x88] sm:$0xff] %vm442, %v427
          %461 = vst.msk [vmem:[%s382 + $0x90] sm:$0xff] %vm442, %v428
          %462 = vst.msk [vmem:[%s382 + $0x98] sm:$0xff] %vm442, %v429
          %463 = vst.msk [vmem:[%s382 + $0xa0] sm:$0xff] %vm442, %v430
          %464 = vst.msk [vmem:[%s382 + $0xa8] sm:$0xff] %vm442, %v431
          %465 = vst.msk [vmem:[%s382 + $0xb0] sm:$0xff] %vm442, %v432
          %466 = vst.msk [vmem:[%s382 + $0xb8] sm:$0xff] %vm442, %v433
          %467 = vst.msk [vmem:[%s382 + $0xc0] sm:$0xff] %vm442, %v434
          %468 = vst.msk [vmem:[%s382 + $0xc8] sm:$0xff] %vm442, %v435
          %469 = vst.msk [vmem:[%s382 + $0xd0] sm:$0xff] %vm442, %v436
          %470 = vst.msk [vmem:[%s382 + $0xd8] sm:$0xff] %vm442, %v437
          %471 = vst.msk [vmem:[%s382 + $0xe0] sm:$0xff] %vm442, %v438
          %472 = vst.msk [vmem:[%s382 + $0xe8] sm:$0xff] %vm442, %v439
          %473 = vst.msk [vmem:[%s382 + $0xf0] sm:$0xff] %vm442, %v440
          %474 = vst.msk [vmem:[%s382 + $0xf8] sm:$0xff] %vm442, %v441
        $region56: #{tpu_custom_call.1} parent=47 // pred_fallthru
          _
        %v475 = vld [vmem:[%s382] sm:$0xff]
        %v476 = vld [vmem:[%s382 + $0x8] sm:$0xff]
        %v477 = vld [vmem:[%s382 + $0x10] sm:$0xff]
        %v478 = vld [vmem:[%s382 + $0x18] sm:$0xff]
        %v479 = vld [vmem:[%s382 + $0x20] sm:$0xff]
        %v480 = vld [vmem:[%s382 + $0x28] sm:$0xff]
        %v481 = vld [vmem:[%s382 + $0x30] sm:$0xff]
        %v482 = vld [vmem:[%s382 + $0x38] sm:$0xff]
        %v483 = vld [vmem:[%s382 + $0x40] sm:$0xff]
        %v484 = vld [vmem:[%s382 + $0x48] sm:$0xff]
        %v485 = vld [vmem:[%s382 + $0x50] sm:$0xff]
        %v486 = vld [vmem:[%s382 + $0x58] sm:$0xff]
        %v487 = vld [vmem:[%s382 + $0x60] sm:$0xff]
        %v488 = vld [vmem:[%s382 + $0x68] sm:$0xff]
        %v489 = vld [vmem:[%s382 + $0x70] sm:$0xff]
        %v490 = vld [vmem:[%s382 + $0x78] sm:$0xff]
        %v491 = vld [vmem:[%s382 + $0x80] sm:$0xff]
        %v492 = vld [vmem:[%s382 + $0x88] sm:$0xff]
        %v493 = vld [vmem:[%s382 + $0x90] sm:$0xff]
        %v494 = vld [vmem:[%s382 + $0x98] sm:$0xff]
        %v495 = vld [vmem:[%s382 + $0xa0] sm:$0xff]
        %v496 = vld [vmem:[%s382 + $0xa8] sm:$0xff]
        %v497 = vld [vmem:[%s382 + $0xb0] sm:$0xff]
        %v498 = vld [vmem:[%s382 + $0xb8] sm:$0xff]
        %v499 = vld [vmem:[%s382 + $0xc0] sm:$0xff]
        %v500 = vld [vmem:[%s382 + $0xc8] sm:$0xff]
        %v501 = vld [vmem:[%s382 + $0xd0] sm:$0xff]
        %v502 = vld [vmem:[%s382 + $0xd8] sm:$0xff]
        %v503 = vld [vmem:[%s382 + $0xe0] sm:$0xff]
        %v504 = vld [vmem:[%s382 + $0xe8] sm:$0xff]
        %v505 = vld [vmem:[%s382 + $0xf0] sm:$0xff]
        %v506 = vld [vmem:[%s382 + $0xf8] sm:$0xff]
        %v507 = vpack.c.bf16 %v476, %v475
        %v508 = vpack.c.bf16 %v478, %v477
        %v509 = vpack.c.bf16 %v480, %v479
        %v510 = vpack.c.bf16 %v482, %v481
        %v511 = vpack.c.bf16 %v484, %v483
        %v512 = vpack.c.bf16 %v486, %v485
        %v513 = vpack.c.bf16 %v488, %v487
        %v514 = vpack.c.bf16 %v490, %v489
        %v515 = vpack.c.bf16 %v492, %v491
        %v516 = vpack.c.bf16 %v494, %v493
        %v517 = vpack.c.bf16 %v496, %v495
        %v518 = vpack.c.bf16 %v498, %v497
        %v519 = vpack.c.bf16 %v500, %v499
        %v520 = vpack.c.bf16 %v502, %v501
        %v521 = vpack.c.bf16 %v504, %v503
        %v522 = vpack.c.bf16 %v506, %v505
        %v523 = vld [vmem:[%s387] sm:$0xf]
        %v524 = vld [vmem:[%s387 + $0x4] sm:$0xf]
        %v527 = vunpack.c.l.b16 %v523
        %v528 = vunpack.c.l.b16 %v524
        %v529 = vpack.c.b16 %v528, %v527
        %vm531 = vcmask 130048
        %v533 = vsel %vm531, %v507, 0
        %v536 = vsel %vm531, %v508, 0
        %v539 = vsel %vm531, %v509, 0
        %v542 = vsel %vm531, %v510, 0
        %v545 = vsel %vm531, %v511, 0
        %v548 = vsel %vm531, %v512, 0
        %v551 = vsel %vm531, %v513, 0
        %v554 = vsel %vm531, %v514, 0
        %v557 = vsel %vm531, %v515, 0
        %v560 = vsel %vm531, %v516, 0
        %v563 = vsel %vm531, %v517, 0
        %v566 = vsel %vm531, %v518, 0
        %v569 = vsel %vm531, %v519, 0
        %v572 = vsel %vm531, %v520, 0
        %v575 = vsel %vm531, %v521, 0
        %v578 = vsel %vm531, %v522, 0
        %580 = vmatprep.subr.bf16.mxu0 0
        %581 = vmatpush1.bf16.msra.mxu0 0
        %582 = vmatprep.subr.bf16.mxu0 0
        %583 = vmatpush1.bf16.msra.mxu0 0
        %584 = vmatprep.subr.bf16.mxu0 0
        %585 = vmatpush1.bf16.msra.mxu0 0
        %586 = vmatprep.subr.bf16.mxu0 0
        %587 = vmatpush1.bf16.msra.mxu0 0
        %588 = vmatprep.subr.bf16.mxu0 0
        %589 = vmatpush1.bf16.msra.mxu0 0
        %590 = vmatprep.subr.bf16.mxu0 0
        %591 = vmatpush1.bf16.msra.mxu0 0
        %592 = vmatprep.subr.bf16.mxu0 0
        %593 = vmatpush1.bf16.msra.mxu0 0
        %594 = vmatprep.subr.bf16.mxu0 0
        %595 = vmatpush1.bf16.msra.mxu0 %v529
        %596 = vmatprep.subr.bf16.mxu0 0
        %597 = vmatpush2.bf16.msra.mxu0 0
        %598 = vmatprep.subr.bf16.mxu0 0
        %599 = vmatpush2.bf16.msra.mxu0 0
        %600 = vmatprep.subr.bf16.mxu0 0
        %601 = vmatpush2.bf16.msra.mxu0 0
        %602 = vmatprep.subr.bf16.mxu0 0
        %603 = vmatpush2.bf16.msra.mxu0 0
        %604 = vmatprep.subr.bf16.mxu0 0
        %605 = vmatpush2.bf16.msra.mxu0 0
        %606 = vmatprep.subr.bf16.mxu0 0
        %607 = vmatpush2.bf16.msra.mxu0 0
        %608 = vmatprep.subr.bf16.mxu0 0
        %609 = vmatpush2.bf16.msra.mxu0 0
        %610 = vmatprep.subr.bf16.mxu0 0
        %611 = vmatpush2.bf16.msra.mxu0 0
        %612 = vmatprep.mubr.bf16.mxu0 0
        %613 = vmatmul.mubr.bf16.gmra.mxu0 %v533
        %v614 = vpop.f32.mrf.mxu0
        %v615 = vadd.f32 0.0, %v614
        %v616 = vpop.f32.mrf.mxu0
        %v617 = vpop.f32.mrf.mxu0
        %v618 = vadd.f32 0.0, %v617
        %v619 = vpop.f32.mrf.mxu0
        %620 = vmatprep.mubr.bf16.mxu0 0
        %621 = vmatmul.mubr.bf16.gmra.mxu0 %v536
        %v622 = vpop.f32.mrf.mxu0
        %v623 = vadd.f32 0.0, %v622
        %v624 = vpop.f32.mrf.mxu0
        %v625 = vpop.f32.mrf.mxu0
        %v626 = vadd.f32 0.0, %v625
        %v627 = vpop.f32.mrf.mxu0
        %628 = vmatprep.mubr.bf16.mxu0 0
        %629 = vmatmul.mubr.bf16.gmra.mxu0 %v539
        %v630 = vpop.f32.mrf.mxu0
        %v631 = vadd.f32 0.0, %v630
        %v632 = vpop.f32.mrf.mxu0
        %v633 = vpop.f32.mrf.mxu0
        %v634 = vadd.f32 0.0, %v633
        %v635 = vpop.f32.mrf.mxu0
        %636 = vmatprep.mubr.bf16.mxu0 0
        %637 = vmatmul.mubr.bf16.gmra.mxu0 %v542
        %v638 = vpop.f32.mrf.mxu0
        %v639 = vadd.f32 0.0, %v638
        %v640 = vpop.f32.mrf.mxu0
        %v641 = vpop.f32.mrf.mxu0
        %v642 = vadd.f32 0.0, %v641
        %v643 = vpop.f32.mrf.mxu0
        %644 = vmatprep.mubr.bf16.mxu0 0
        %645 = vmatmul.mubr.bf16.gmra.mxu0 %v545
        %v646 = vpop.f32.mrf.mxu0
        %v647 = vadd.f32 0.0, %v646
        %v648 = vpop.f32.mrf.mxu0
        %v649 = vpop.f32.mrf.mxu0
        %v650 = vadd.f32 0.0, %v649
        %v651 = vpop.f32.mrf.mxu0
        %652 = vmatprep.mubr.bf16.mxu0 0
        %653 = vmatmul.mubr.bf16.gmra.mxu0 %v548
        %v654 = vpop.f32.mrf.mxu0
        %v655 = vadd.f32 0.0, %v654
        %v656 = vpop.f32.mrf.mxu0
        %v657 = vpop.f32.mrf.mxu0
        %v658 = vadd.f32 0.0, %v657
        %v659 = vpop.f32.mrf.mxu0
        %660 = vmatprep.mubr.bf16.mxu0 0
        %661 = vmatmul.mubr.bf16.gmra.mxu0 %v551
        %v662 = vpop.f32.mrf.mxu0
        %v663 = vadd.f32 0.0, %v662
        %v664 = vpop.f32.mrf.mxu0
        %v665 = vpop.f32.mrf.mxu0
        %v666 = vadd.f32 0.0, %v665
        %v667 = vpop.f32.mrf.mxu0
        %668 = vmatprep.mubr.bf16.mxu0 0
        %669 = vmatmul.mubr.bf16.gmra.mxu0 %v554
        %v670 = vpop.f32.mrf.mxu0
        %v671 = vadd.f32 0.0, %v670
        %v672 = vpop.f32.mrf.mxu0
        %v673 = vpop.f32.mrf.mxu0
        %v674 = vadd.f32 0.0, %v673
        %v675 = vpop.f32.mrf.mxu0
        %676 = vmatprep.mubr.bf16.mxu0 0
        %677 = vmatmul.mubr.bf16.gmra.mxu0 %v557
        %v678 = vpop.f32.mrf.mxu0
        %v679 = vadd.f32 0.0, %v678
        %v680 = vpop.f32.mrf.mxu0
        %v681 = vpop.f32.mrf.mxu0
        %v682 = vadd.f32 0.0, %v681
        %v683 = vpop.f32.mrf.mxu0
        %684 = vmatprep.mubr.bf16.mxu0 0
        %685 = vmatmul.mubr.bf16.gmra.mxu0 %v560
        %v686 = vpop.f32.mrf.mxu0
        %v687 = vadd.f32 0.0, %v686
        %v688 = vpop.f32.mrf.mxu0
        %v689 = vpop.f32.mrf.mxu0
        %v690 = vadd.f32 0.0, %v689
        %v691 = vpop.f32.mrf.mxu0
        %692 = vmatprep.mubr.bf16.mxu0 0
        %693 = vmatmul.mubr.bf16.gmra.mxu0 %v563
        %v694 = vpop.f32.mrf.mxu0
        %v695 = vadd.f32 0.0, %v694
        %v696 = vpop.f32.mrf.mxu0
        %v697 = vpop.f32.mrf.mxu0
        %v698 = vadd.f32 0.0, %v697
        %v699 = vpop.f32.mrf.mxu0
        %700 = vmatprep.mubr.bf16.mxu0 0
        %701 = vmatmul.mubr.bf16.gmra.mxu0 %v566
        %v702 = vpop.f32.mrf.mxu0
        %v703 = vadd.f32 0.0, %v702
        %v704 = vpop.f32.mrf.mxu0
        %v705 = vpop.f32.mrf.mxu0
        %v706 = vadd.f32 0.0, %v705
        %v707 = vpop.f32.mrf.mxu0
        %708 = vmatprep.mubr.bf16.mxu0 0
        %709 = vmatmul.mubr.bf16.gmra.mxu0 %v569
        %v710 = vpop.f32.mrf.mxu0
        %v711 = vadd.f32 0.0, %v710
        %v712 = vpop.f32.mrf.mxu0
        %v713 = vpop.f32.mrf.mxu0
        %v714 = vadd.f32 0.0, %v713
        %v715 = vpop.f32.mrf.mxu0
        %716 = vmatprep.mubr.bf16.mxu0 0
        %717 = vmatmul.mubr.bf16.gmra.mxu0 %v572
        %v718 = vpop.f32.mrf.mxu0
        %v719 = vadd.f32 0.0, %v718
        %v720 = vpop.f32.mrf.mxu0
        %v721 = vpop.f32.mrf.mxu0
        %v722 = vadd.f32 0.0, %v721
        %v723 = vpop.f32.mrf.mxu0
        %724 = vmatprep.mubr.bf16.mxu0 0
        %725 = vmatmul.mubr.bf16.gmra.mxu0 %v575
        %v726 = vpop.f32.mrf.mxu0
        %v727 = vadd.f32 0.0, %v726
        %v728 = vpop.f32.mrf.mxu0
        %v729 = vpop.f32.mrf.mxu0
        %v730 = vadd.f32 0.0, %v729
        %v731 = vpop.f32.mrf.mxu0
        %732 = vmatprep.mubr.bf16.mxu0 0
        %733 = vmatmul.mubr.bf16.gmra.mxu0 %v578
        %v734 = vpop.f32.mrf.mxu0
        %v735 = vadd.f32 0.0, %v734
        %v736 = vpop.f32.mrf.mxu0
        %v737 = vpop.f32.mrf.mxu0
        %v738 = vadd.f32 0.0, %v737
        %v739 = vpop.f32.mrf.mxu0
        %740 = vdwg.mxu0
        %v741 = vld [vmem:[%s390] sm:$0x1]
        %v743 = vlaneseq
        %v744 = vshrl.u32 %v743, 7
        %v745 = vsub.s32 0, %v744
        %v746 = vrot.slane %v741, %v745
        %v748 = vmul.f32 %v615, %v746
        %v749 = vmul.f32 %v618, %v746
        %v750 = vmul.f32 %v623, %v746
        %v751 = vmul.f32 %v626, %v746
        %v752 = vmul.f32 %v631, %v746
        %v753 = vmul.f32 %v634, %v746
        %v754 = vmul.f32 %v639, %v746
        %v755 = vmul.f32 %v642, %v746
        %v756 = vmul.f32 %v647, %v746
        %v757 = vmul.f32 %v650, %v746
        %v758 = vmul.f32 %v655, %v746
        %v759 = vmul.f32 %v658, %v746
        %v760 = vmul.f32 %v663, %v746
        %v761 = vmul.f32 %v666, %v746
        %v762 = vmul.f32 %v671, %v746
        %v763 = vmul.f32 %v674, %v746
        %v764 = vmul.f32 %v679, %v746
        %v765 = vmul.f32 %v682, %v746
        %v766 = vmul.f32 %v687, %v746
        %v767 = vmul.f32 %v690, %v746
        %v768 = vmul.f32 %v695, %v746
        %v769 = vmul.f32 %v698, %v746
        %v770 = vmul.f32 %v703, %v746
        %v771 = vmul.f32 %v706, %v746
        %v772 = vmul.f32 %v711, %v746
        %v773 = vmul.f32 %v714, %v746
        %v774 = vmul.f32 %v719, %v746
        %v775 = vmul.f32 %v722, %v746
        %v776 = vmul.f32 %v727, %v746
        %v777 = vmul.f32 %v730, %v746
        %v778 = vmul.f32 %v735, %v746
        %v779 = vmul.f32 %v738, %v746
        %v780 = vld [vmem:[%s393] sm:$0x1]
        %v782 = vlaneseq
        %v783 = vshrl.u32 %v782, 7
        %v784 = vsub.s32 0, %v783
        %v785 = vrot.slane %v780, %v784
        %v787 = vadd.f32 %v748, %v785
        %v788 = vadd.f32 %v749, %v785
        %v789 = vadd.f32 %v750, %v785
        %v790 = vadd.f32 %v751, %v785
        %v791 = vadd.f32 %v752, %v785
        %v792 = vadd.f32 %v753, %v785
        %v793 = vadd.f32 %v754, %v785
        %v794 = vadd.f32 %v755, %v785
        %v795 = vadd.f32 %v756, %v785
        %v796 = vadd.f32 %v757, %v785
        %v797 = vadd.f32 %v758, %v785
        %v798 = vadd.f32 %v759, %v785
        %v799 = vadd.f32 %v760, %v785
        %v800 = vadd.f32 %v761, %v785
        %v801 = vadd.f32 %v762, %v785
        %v802 = vadd.f32 %v763, %v785
        %v803 = vadd.f32 %v764, %v785
        %v804 = vadd.f32 %v765, %v785
        %v805 = vadd.f32 %v766, %v785
        %v806 = vadd.f32 %v767, %v785
        %v807 = vadd.f32 %v768, %v785
        %v808 = vadd.f32 %v769, %v785
        %v809 = vadd.f32 %v770, %v785
        %v810 = vadd.f32 %v771, %v785
        %v811 = vadd.f32 %v772, %v785
        %v812 = vadd.f32 %v773, %v785
        %v813 = vadd.f32 %v774, %v785
        %v814 = vadd.f32 %v775, %v785
        %v815 = vadd.f32 %v776, %v785
        %v816 = vadd.f32 %v777, %v785
        %v817 = vadd.f32 %v778, %v785
        %v818 = vadd.f32 %v779, %v785
        %v819 = vxor.u32 %v787, 2147483648
        %v820 = vxor.u32 %v788, 2147483648
        %v821 = vxor.u32 %v789, 2147483648
        %v822 = vxor.u32 %v790, 2147483648
        %v823 = vxor.u32 %v791, 2147483648
        %v824 = vxor.u32 %v792, 2147483648
        %v825 = vxor.u32 %v793, 2147483648
        %v826 = vxor.u32 %v794, 2147483648
        %v827 = vxor.u32 %v795, 2147483648
        %v828 = vxor.u32 %v796, 2147483648
        %v829 = vxor.u32 %v797, 2147483648
        %v830 = vxor.u32 %v798, 2147483648
        %v831 = vxor.u32 %v799, 2147483648
        %v832 = vxor.u32 %v800, 2147483648
        %v833 = vxor.u32 %v801, 2147483648
        %v834 = vxor.u32 %v802, 2147483648
        %v835 = vxor.u32 %v803, 2147483648
        %v836 = vxor.u32 %v804, 2147483648
        %v837 = vxor.u32 %v805, 2147483648
        %v838 = vxor.u32 %v806, 2147483648
        %v839 = vxor.u32 %v807, 2147483648
        %v840 = vxor.u32 %v808, 2147483648
        %v841 = vxor.u32 %v809, 2147483648
        %v842 = vxor.u32 %v810, 2147483648
        %v843 = vxor.u32 %v811, 2147483648
        %v844 = vxor.u32 %v812, 2147483648
        %v845 = vxor.u32 %v813, 2147483648
        %v846 = vxor.u32 %v814, 2147483648
        %v847 = vxor.u32 %v815, 2147483648
        %v848 = vxor.u32 %v816, 2147483648
        %v849 = vxor.u32 %v817, 2147483648
        %v850 = vxor.u32 %v818, 2147483648
        %v851 = vmul.f32 %v819, 1.442695
        %v852 = vpow.pop %v851
        %v853 = vmul.f32 %v820, 1.442695
        %v854 = vpow.pop %v853
        %v855 = vmul.f32 %v821, 1.442695
        %v856 = vpow.pop %v855
        %v857 = vmul.f32 %v822, 1.442695
        %v858 = vpow.pop %v857
        %v859 = vmul.f32 %v823, 1.442695
        %v860 = vpow.pop %v859
        %v861 = vmul.f32 %v824, 1.442695
        %v862 = vpow.pop %v861
        %v863 = vmul.f32 %v825, 1.442695
        %v864 = vpow.pop %v863
        %v865 = vmul.f32 %v826, 1.442695
        %v866 = vpow.pop %v865
        %v867 = vmul.f32 %v827, 1.442695
        %v868 = vpow.pop %v867
        %v869 = vmul.f32 %v828, 1.442695
        %v870 = vpow.pop %v869
        %v871 = vmul.f32 %v829, 1.442695
        %v872 = vpow.pop %v871
        %v873 = vmul.f32 %v830, 1.442695
        %v874 = vpow.pop %v873
        %v875 = vmul.f32 %v831, 1.442695
        %v876 = vpow.pop %v875
        %v877 = vmul.f32 %v832, 1.442695
        %v878 = vpow.pop %v877
        %v879 = vmul.f32 %v833, 1.442695
        %v880 = vpow.pop %v879
        %v881 = vmul.f32 %v834, 1.442695
        %v882 = vpow.pop %v881
        %v883 = vmul.f32 %v835, 1.442695
        %v884 = vpow.pop %v883
        %v885 = vmul.f32 %v836, 1.442695
        %v886 = vpow.pop %v885
        %v887 = vmul.f32 %v837, 1.442695
        %v888 = vpow.pop %v887
        %v889 = vmul.f32 %v838, 1.442695
        %v890 = vpow.pop %v889
        %v891 = vmul.f32 %v839, 1.442695
        %v892 = vpow.pop %v891
        %v893 = vmul.f32 %v840, 1.442695
        %v894 = vpow.pop %v893
        %v895 = vmul.f32 %v841, 1.442695
        %v896 = vpow.pop %v895
        %v897 = vmul.f32 %v842, 1.442695
        %v898 = vpow.pop %v897
        %v899 = vmul.f32 %v843, 1.442695
        %v900 = vpow.pop %v899
        %v901 = vmul.f32 %v844, 1.442695
        %v902 = vpow.pop %v901
        %v903 = vmul.f32 %v845, 1.442695
        %v904 = vpow.pop %v903
        %v905 = vmul.f32 %v846, 1.442695
        %v906 = vpow.pop %v905
        %v907 = vmul.f32 %v847, 1.442695
        %v908 = vpow.pop %v907
        %v909 = vmul.f32 %v848, 1.442695
        %v910 = vpow.pop %v909
        %v911 = vmul.f32 %v849, 1.442695
        %v912 = vpow.pop %v911
        %v913 = vmul.f32 %v850, 1.442695
        %v914 = vpow.pop %v913
        %v915 = vadd.f32 %v852, 1.0
        %v916 = vadd.f32 %v854, 1.0
        %v917 = vadd.f32 %v856, 1.0
        %v918 = vadd.f32 %v858, 1.0
        %v919 = vadd.f32 %v860, 1.0
        %v920 = vadd.f32 %v862, 1.0
        %v921 = vadd.f32 %v864, 1.0
        %v922 = vadd.f32 %v866, 1.0
        %v923 = vadd.f32 %v868, 1.0
        %v924 = vadd.f32 %v870, 1.0
        %v925 = vadd.f32 %v872, 1.0
        %v926 = vadd.f32 %v874, 1.0
        %v927 = vadd.f32 %v876, 1.0
        %v928 = vadd.f32 %v878, 1.0
        %v929 = vadd.f32 %v880, 1.0
        %v930 = vadd.f32 %v882, 1.0
        %v931 = vadd.f32 %v884, 1.0
        %v932 = vadd.f32 %v886, 1.0
        %v933 = vadd.f32 %v888, 1.0
        %v934 = vadd.f32 %v890, 1.0
        %v935 = vadd.f32 %v892, 1.0
        %v936 = vadd.f32 %v894, 1.0
        %v937 = vadd.f32 %v896, 1.0
        %v938 = vadd.f32 %v898, 1.0
        %v939 = vadd.f32 %v900, 1.0
        %v940 = vadd.f32 %v902, 1.0
        %v941 = vadd.f32 %v904, 1.0
        %v942 = vadd.f32 %v906, 1.0
        %v943 = vadd.f32 %v908, 1.0
        %v944 = vadd.f32 %v910, 1.0
        %v945 = vadd.f32 %v912, 1.0
        %v946 = vadd.f32 %v914, 1.0
        %v947 = vrcp.pop %v915
        %v948 = vmul.f32 1.0, %v947
        %v949 = vrcp.pop %v916
        %v950 = vmul.f32 1.0, %v949
        %v951 = vrcp.pop %v917
        %v952 = vmul.f32 1.0, %v951
        %v953 = vrcp.pop %v918
        %v954 = vmul.f32 1.0, %v953
        %v955 = vrcp.pop %v919
        %v956 = vmul.f32 1.0, %v955
        %v957 = vrcp.pop %v920
        %v958 = vmul.f32 1.0, %v957
        %v959 = vrcp.pop %v921
        %v960 = vmul.f32 1.0, %v959
        %v961 = vrcp.pop %v922
        %v962 = vmul.f32 1.0, %v961
        %v963 = vrcp.pop %v923
        %v964 = vmul.f32 1.0, %v963
        %v965 = vrcp.pop %v924
        %v966 = vmul.f32 1.0, %v965
        %v967 = vrcp.pop %v925
        %v968 = vmul.f32 1.0, %v967
        %v969 = vrcp.pop %v926
        %v970 = vmul.f32 1.0, %v969
        %v971 = vrcp.pop %v927
        %v972 = vmul.f32 1.0, %v971
        %v973 = vrcp.pop %v928
        %v974 = vmul.f32 1.0, %v973
        %v975 = vrcp.pop %v929
        %v976 = vmul.f32 1.0, %v975
        %v977 = vrcp.pop %v930
        %v978 = vmul.f32 1.0, %v977
        %v979 = vrcp.pop %v931
        %v980 = vmul.f32 1.0, %v979
        %v981 = vrcp.pop %v932
        %v982 = vmul.f32 1.0, %v981
        %v983 = vrcp.pop %v933
        %v984 = vmul.f32 1.0, %v983
        %v985 = vrcp.pop %v934
        %v986 = vmul.f32 1.0, %v985
        %v987 = vrcp.pop %v935
        %v988 = vmul.f32 1.0, %v987
        %v989 = vrcp.pop %v936
        %v990 = vmul.f32 1.0, %v989
        %v991 = vrcp.pop %v937
        %v992 = vmul.f32 1.0, %v991
        %v993 = vrcp.pop %v938
        %v994 = vmul.f32 1.0, %v993
        %v995 = vrcp.pop %v939
        %v996 = vmul.f32 1.0, %v995
        %v997 = vrcp.pop %v940
        %v998 = vmul.f32 1.0, %v997
        %v999 = vrcp.pop %v941
        %v1000 = vmul.f32 1.0, %v999
        %v1001 = vrcp.pop %v942
        %v1002 = vmul.f32 1.0, %v1001
        %v1003 = vrcp.pop %v943
        %v1004 = vmul.f32 1.0, %v1003
        %v1005 = vrcp.pop %v944
        %v1006 = vmul.f32 1.0, %v1005
        %v1007 = vrcp.pop %v945
        %v1008 = vmul.f32 1.0, %v1007
        %v1009 = vrcp.pop %v946
        %v1010 = vmul.f32 1.0, %v1009
        %v1011 = vmul.f32 %v787, %v948
        %v1012 = vmul.f32 %v788, %v950
        %v1013 = vmul.f32 %v789, %v952
        %v1014 = vmul.f32 %v790, %v954
        %v1015 = vmul.f32 %v791, %v956
        %v1016 = vmul.f32 %v792, %v958
        %v1017 = vmul.f32 %v793, %v960
        %v1018 = vmul.f32 %v794, %v962
        %v1019 = vmul.f32 %v795, %v964
        %v1020 = vmul.f32 %v796, %v966
        %v1021 = vmul.f32 %v797, %v968
        %v1022 = vmul.f32 %v798, %v970
        %v1023 = vmul.f32 %v799, %v972
        %v1024 = vmul.f32 %v800, %v974
        %v1025 = vmul.f32 %v801, %v976
        %v1026 = vmul.f32 %v802, %v978
        %v1027 = vmul.f32 %v803, %v980
        %v1028 = vmul.f32 %v804, %v982
        %v1029 = vmul.f32 %v805, %v984
        %v1030 = vmul.f32 %v806, %v986
        %v1031 = vmul.f32 %v807, %v988
        %v1032 = vmul.f32 %v808, %v990
        %v1033 = vmul.f32 %v809, %v992
        %v1034 = vmul.f32 %v810, %v994
        %v1035 = vmul.f32 %v811, %v996
        %v1036 = vmul.f32 %v812, %v998
        %v1037 = vmul.f32 %v813, %v1000
        %v1038 = vmul.f32 %v814, %v1002
        %v1039 = vmul.f32 %v815, %v1004
        %v1040 = vmul.f32 %v816, %v1006
        %v1041 = vmul.f32 %v817, %v1008
        %v1042 = vmul.f32 %v818, %v1010
        %v1043 = vpack.c.bf16 %v1012, %v1011
        %v1044 = vpack.c.bf16 %v1014, %v1013
        %v1045 = vpack.c.bf16 %v1016, %v1015
        %v1046 = vpack.c.bf16 %v1018, %v1017
        %v1047 = vpack.c.bf16 %v1020, %v1019
        %v1048 = vpack.c.bf16 %v1022, %v1021
        %v1049 = vpack.c.bf16 %v1024, %v1023
        %v1050 = vpack.c.bf16 %v1026, %v1025
        %v1051 = vpack.c.bf16 %v1028, %v1027
        %v1052 = vpack.c.bf16 %v1030, %v1029
        %v1053 = vpack.c.bf16 %v1032, %v1031
        %v1054 = vpack.c.bf16 %v1034, %v1033
        %v1055 = vpack.c.bf16 %v1036, %v1035
        %v1056 = vpack.c.bf16 %v1038, %v1037
        %v1057 = vpack.c.bf16 %v1040, %v1039
        %v1058 = vpack.c.bf16 %v1042, %v1041
        %v1060 = vshrl.u32 %v1043, 16
        %v1062 = vrot.slane %v1060, 7
        %v1063 = vshll.u32 %v1043, 16
        %v1065 = vor.u32 %v1062, %v1063
        %v1067 = vshrl.u32 %v1044, 16
        %v1069 = vrot.slane %v1067, 7
        %v1070 = vshll.u32 %v1044, 16
        %v1072 = vor.u32 %v1069, %v1070
        %v1074 = vshrl.u32 %v1045, 16
        %v1076 = vrot.slane %v1074, 7
        %v1077 = vshll.u32 %v1045, 16
        %v1079 = vor.u32 %v1076, %v1077
        %v1081 = vshrl.u32 %v1046, 16
        %v1083 = vrot.slane %v1081, 7
        %v1084 = vshll.u32 %v1046, 16
        %v1086 = vor.u32 %v1083, %v1084
        %v1088 = vshrl.u32 %v1047, 16
        %v1090 = vrot.slane %v1088, 7
        %v1091 = vshll.u32 %v1047, 16
        %v1093 = vor.u32 %v1090, %v1091
        %v1095 = vshrl.u32 %v1048, 16
        %v1097 = vrot.slane %v1095, 7
        %v1098 = vshll.u32 %v1048, 16
        %v1100 = vor.u32 %v1097, %v1098
        %v1102 = vshrl.u32 %v1049, 16
        %v1104 = vrot.slane %v1102, 7
        %v1105 = vshll.u32 %v1049, 16
        %v1107 = vor.u32 %v1104, %v1105
        %v1109 = vshrl.u32 %v1050, 16
        %v1111 = vrot.slane %v1109, 7
        %v1112 = vshll.u32 %v1050, 16
        %v1114 = vor.u32 %v1111, %v1112
        %v1116 = vshrl.u32 %v1051, 16
        %v1118 = vrot.slane %v1116, 7
        %v1119 = vshll.u32 %v1051, 16
        %v1121 = vor.u32 %v1118, %v1119
        %v1123 = vshrl.u32 %v1052, 16
        %v1125 = vrot.slane %v1123, 7
        %v1126 = vshll.u32 %v1052, 16
        %v1128 = vor.u32 %v1125, %v1126
        %v1130 = vshrl.u32 %v1053, 16
        %v1132 = vrot.slane %v1130, 7
        %v1133 = vshll.u32 %v1053, 16
        %v1135 = vor.u32 %v1132, %v1133
        %v1137 = vshrl.u32 %v1054, 16
        %v1139 = vrot.slane %v1137, 7
        %v1140 = vshll.u32 %v1054, 16
        %v1142 = vor.u32 %v1139, %v1140
        %v1144 = vshrl.u32 %v1055, 16
        %v1146 = vrot.slane %v1144, 7
        %v1147 = vshll.u32 %v1055, 16
        %v1149 = vor.u32 %v1146, %v1147
        %v1151 = vshrl.u32 %v1056, 16
        %v1153 = vrot.slane %v1151, 7
        %v1154 = vshll.u32 %v1056, 16
        %v1156 = vor.u32 %v1153, %v1154
        %v1158 = vshrl.u32 %v1057, 16
        %v1160 = vrot.slane %v1158, 7
        %v1161 = vshll.u32 %v1057, 16
        %v1163 = vor.u32 %v1160, %v1161
        %v1165 = vshrl.u32 %v1058, 16
        %v1167 = vrot.slane %v1165, 7
        %v1168 = vshll.u32 %v1058, 16
        %v1170 = vor.u32 %v1167, %v1168
        %vm1187 = vcmask 1040384
        %vm1188 = vsmask.f32 256
        %vm1189 = vmand %vm1187, %vm1188
        %v1190 = vsel %vm1189, 0, %v1065
        %v1191 = vsel %vm1189, 0, %v1072
        %v1192 = vsel %vm1189, 0, %v1079
        %v1193 = vsel %vm1189, 0, %v1086
        %v1194 = vsel %vm1189, 0, %v1093
        %v1195 = vsel %vm1189, 0, %v1100
        %v1196 = vsel %vm1189, 0, %v1107
        %v1197 = vsel %vm1189, 0, %v1114
        %v1198 = vsel %vm1189, 0, %v1121
        %v1199 = vsel %vm1189, 0, %v1128
        %v1200 = vsel %vm1189, 0, %v1135
        %v1201 = vsel %vm1189, 0, %v1142
        %v1202 = vsel %vm1189, 0, %v1149
        %v1203 = vsel %vm1189, 0, %v1156
        %v1204 = vsel %vm1189, 0, %v1163
        %v1205 = vsel %vm1189, 0, %v1170
        %v1206 = vrot.slane %v1063, 1
        %v1207 = vor.u32 %v1060, %v1206
        %v1208 = vrot.slane %v1070, 1
        %v1209 = vor.u32 %v1067, %v1208
        %v1210 = vrot.slane %v1077, 1
        %v1211 = vor.u32 %v1074, %v1210
        %v1212 = vrot.slane %v1084, 1
        %v1213 = vor.u32 %v1081, %v1212
        %v1214 = vrot.slane %v1091, 1
        %v1215 = vor.u32 %v1088, %v1214
        %v1216 = vrot.slane %v1098, 1
        %v1217 = vor.u32 %v1095, %v1216
        %v1218 = vrot.slane %v1105, 1
        %v1219 = vor.u32 %v1102, %v1218
        %v1220 = vrot.slane %v1112, 1
        %v1221 = vor.u32 %v1109, %v1220
        %v1222 = vrot.slane %v1119, 1
        %v1223 = vor.u32 %v1116, %v1222
        %v1224 = vrot.slane %v1126, 1
        %v1225 = vor.u32 %v1123, %v1224
        %v1226 = vrot.slane %v1133, 1
        %v1227 = vor.u32 %v1130, %v1226
        %v1228 = vrot.slane %v1140, 1
        %v1229 = vor.u32 %v1137, %v1228
        %v1230 = vrot.slane %v1147, 1
        %v1231 = vor.u32 %v1144, %v1230
        %v1232 = vrot.slane %v1154, 1
        %v1233 = vor.u32 %v1151, %v1232
        %v1234 = vrot.slane %v1161, 1
        %v1235 = vor.u32 %v1158, %v1234
        %v1236 = vrot.slane %v1168, 1
        %v1237 = vor.u32 %v1165, %v1236
        %vm1254 = vcmask 1047552
        %vm1255 = vsmask.f32 7424
        %vm1256 = vmand %vm1254, %vm1255
        %v1257 = vsel %vm1256, %v1207, 0
        %v1258 = vsel %vm1256, %v1209, 0
        %v1259 = vsel %vm1256, %v1211, 0
        %v1260 = vsel %vm1256, %v1213, 0
        %v1261 = vsel %vm1256, %v1215, 0
        %v1262 = vsel %vm1256, %v1217, 0
        %v1263 = vsel %vm1256, %v1219, 0
        %v1264 = vsel %vm1256, %v1221, 0
        %v1265 = vsel %vm1256, %v1223, 0
        %v1266 = vsel %vm1256, %v1225, 0
        %v1267 = vsel %vm1256, %v1227, 0
        %v1268 = vsel %vm1256, %v1229, 0
        %v1269 = vsel %vm1256, %v1231, 0
        %v1270 = vsel %vm1256, %v1233, 0
        %v1271 = vsel %vm1256, %v1235, 0
        %v1272 = vsel %vm1256, %v1237, 0
        %1289 = vrot.lane.b32.xlu0 %v1043, 8
        %v1290 = vpop.permute.xlu0 %1289
        %1291 = vrot.lane.b32.xlu0 %v1044, 8
        %v1292 = vpop.permute.xlu0 %1291
        %1293 = vrot.lane.b32.xlu0 %v1045, 8
        %v1294 = vpop.permute.xlu0 %1293
        %1295 = vrot.lane.b32.xlu0 %v1046, 8
        %v1296 = vpop.permute.xlu0 %1295
        %1297 = vrot.lane.b32.xlu0 %v1047, 8
        %v1298 = vpop.permute.xlu0 %1297
        %1299 = vrot.lane.b32.xlu0 %v1048, 8
        %v1300 = vpop.permute.xlu0 %1299
        %1301 = vrot.lane.b32.xlu0 %v1049, 8
        %v1302 = vpop.permute.xlu0 %1301
        %1303 = vrot.lane.b32.xlu0 %v1050, 8
        %v1304 = vpop.permute.xlu0 %1303
        %1305 = vrot.lane.b32.xlu0 %v1051, 8
        %v1306 = vpop.permute.xlu0 %1305
        %1307 = vrot.lane.b32.xlu0 %v1052, 8
        %v1308 = vpop.permute.xlu0 %1307
        %1309 = vrot.lane.b32.xlu0 %v1053, 8
        %v1310 = vpop.permute.xlu0 %1309
        %1311 = vrot.lane.b32.xlu0 %v1054, 8
        %v1312 = vpop.permute.xlu0 %1311
        %1313 = vrot.lane.b32.xlu0 %v1055, 8
        %v1314 = vpop.permute.xlu0 %1313
        %1315 = vrot.lane.b32.xlu0 %v1056, 8
        %v1316 = vpop.permute.xlu0 %1315
        %1317 = vrot.lane.b32.xlu0 %v1057, 8
        %v1318 = vpop.permute.xlu0 %1317
        %1319 = vrot.lane.b32.xlu0 %v1058, 8
        %v1320 = vpop.permute.xlu0 %1319
        %1337 = vrot.lane.b32.xlu0 %v1257, 16
        %v1338 = vpop.permute.xlu0 %1337
        %1339 = vrot.lane.b32.xlu0 %v1258, 16
        %v1340 = vpop.permute.xlu0 %1339
        %1341 = vrot.lane.b32.xlu0 %v1259, 16
        %v1342 = vpop.permute.xlu0 %1341
        %1343 = vrot.lane.b32.xlu0 %v1260, 16
        %v1344 = vpop.permute.xlu0 %1343
        %1345 = vrot.lane.b32.xlu0 %v1261, 16
        %v1346 = vpop.permute.xlu0 %1345
        %1347 = vrot.lane.b32.xlu0 %v1262, 16
        %v1348 = vpop.permute.xlu0 %1347
        %1349 = vrot.lane.b32.xlu0 %v1263, 16
        %v1350 = vpop.permute.xlu0 %1349
        %1351 = vrot.lane.b32.xlu0 %v1264, 16
        %v1352 = vpop.permute.xlu0 %1351
        %1353 = vrot.lane.b32.xlu0 %v1265, 16
        %v1354 = vpop.permute.xlu0 %1353
        %1355 = vrot.lane.b32.xlu0 %v1266, 16
        %v1356 = vpop.permute.xlu0 %1355
        %1357 = vrot.lane.b32.xlu0 %v1267, 16
        %v1358 = vpop.permute.xlu0 %1357
        %1359 = vrot.lane.b32.xlu0 %v1268, 16
        %v1360 = vpop.permute.xlu0 %1359
        %1361 = vrot.lane.b32.xlu0 %v1269, 16
        %v1362 = vpop.permute.xlu0 %1361
        %1363 = vrot.lane.b32.xlu0 %v1270, 16
        %v1364 = vpop.permute.xlu0 %1363
        %1365 = vrot.lane.b32.xlu0 %v1271, 16
        %v1366 = vpop.permute.xlu0 %1365
        %1367 = vrot.lane.b32.xlu0 %v1272, 16
        %v1368 = vpop.permute.xlu0 %1367
        %vm1369 = vcmask 64512
        %v1372 = vsel %vm1369, %v1190, %v1290
        %v1375 = vsel %vm1369, %v1191, %v1292
        %v1378 = vsel %vm1369, %v1192, %v1294
        %v1381 = vsel %vm1369, %v1193, %v1296
        %v1384 = vsel %vm1369, %v1194, %v1298
        %v1387 = vsel %vm1369, %v1195, %v1300
        %v1390 = vsel %vm1369, %v1196, %v1302
        %v1393 = vsel %vm1369, %v1197, %v1304
        %v1396 = vsel %vm1369, %v1198, %v1306
        %v1399 = vsel %vm1369, %v1199, %v1308
        %v1402 = vsel %vm1369, %v1200, %v1310
        %v1405 = vsel %vm1369, %v1201, %v1312
        %v1408 = vsel %vm1369, %v1202, %v1314
        %v1411 = vsel %vm1369, %v1203, %v1316
        %v1414 = vsel %vm1369, %v1204, %v1318
        %v1417 = vsel %vm1369, %v1205, %v1320
        %v1419 = vsel %vm531, %v1372, %v1338
        %v1421 = vsel %vm531, %v1375, %v1340
        %v1423 = vsel %vm531, %v1378, %v1342
        %v1425 = vsel %vm531, %v1381, %v1344
        %v1427 = vsel %vm531, %v1384, %v1346
        %v1429 = vsel %vm531, %v1387, %v1348
        %v1431 = vsel %vm531, %v1390, %v1350
        %v1433 = vsel %vm531, %v1393, %v1352
        %v1435 = vsel %vm531, %v1396, %v1354
        %v1437 = vsel %vm531, %v1399, %v1356
        %v1439 = vsel %vm531, %v1402, %v1358
        %v1441 = vsel %vm531, %v1405, %v1360
        %v1443 = vsel %vm531, %v1408, %v1362
        %v1445 = vsel %vm531, %v1411, %v1364
        %v1447 = vsel %vm531, %v1414, %v1366
        %v1449 = vsel %vm531, %v1417, %v1368
        %v1450 = vld [vmem:[%s398] sm:$0xf]
        %v1451 = vld [vmem:[%s398 + $0x4] sm:$0xf]
        %v1452 = vld [vmem:[%s398 + $0x8] sm:$0xf]
        %v1453 = vld [vmem:[%s398 + $0xc] sm:$0xf]
        %v1454 = vld [vmem:[%s398 + $0x10] sm:$0xf]
        %v1455 = vld [vmem:[%s398 + $0x14] sm:$0xf]
        %v1456 = vld [vmem:[%s398 + $0x18] sm:$0xf]
        %v1457 = vld [vmem:[%s398 + $0x1c] sm:$0xf]
        %v1458 = vld [vmem:[%s398 + $0x20] sm:$0xf]
        %v1462 = vunpack.c.l.b16 %v1453
        %v1463 = vunpack.c.l.b16 %v1454
        %v1464 = vunpack.c.l.b16 %v1455
        %v1465 = vpack.c.b16 %v1463, %v1462
        %v1466 = vpack.c.b16 %v1464, %v1464
        %vm1468 = vcmask 195584
        %v1469 = vsel %vm1468, %v1419, 0
        %v1471 = vsel %vm1468, %v1421, 0
        %v1473 = vsel %vm1468, %v1423, 0
        %v1475 = vsel %vm1468, %v1425, 0
        %v1477 = vsel %vm1468, %v1427, 0
        %v1479 = vsel %vm1468, %v1429, 0
        %v1481 = vsel %vm1468, %v1431, 0
        %v1483 = vsel %vm1468, %v1433, 0
        %v1485 = vsel %vm1468, %v1435, 0
        %v1487 = vsel %vm1468, %v1437, 0
        %v1489 = vsel %vm1468, %v1439, 0
        %v1491 = vsel %vm1468, %v1441, 0
        %v1493 = vsel %vm1468, %v1443, 0
        %v1495 = vsel %vm1468, %v1445, 0
        %v1497 = vsel %vm1468, %v1447, 0
        %v1499 = vsel %vm1468, %v1449, 0
        %vm1501 = vcmask 1043456
        %v1503 = vsel %vm1501, %v1466, 0
        %1505 = vmatprep.subr.bf16.mxu0 0
        %1506 = vmatpush1.bf16.msra.mxu0 0
        %1507 = vmatprep.subr.bf16.mxu0 0
        %1508 = vmatpush1.bf16.msra.mxu0 0
        %1509 = vmatprep.subr.bf16.mxu0 0
        %1510 = vmatpush1.bf16.msra.mxu0 0
        %1511 = vmatprep.subr.bf16.mxu0 0
        %1512 = vmatpush1.bf16.msra.mxu0 0
        %1513 = vmatprep.subr.bf16.mxu0 0
        %1514 = vmatpush1.bf16.msra.mxu0 0
        %1515 = vmatprep.subr.bf16.mxu0 0
        %1516 = vmatpush1.bf16.msra.mxu0 0
        %1517 = vmatprep.subr.bf16.mxu0 0
        %1518 = vmatpush1.bf16.msra.mxu0 %v1503
        %1519 = vmatprep.subr.bf16.mxu0 0
        %1520 = vmatpush1.bf16.msra.mxu0 %v1465
        %1521 = vmatprep.subr.bf16.mxu0 0
        %1522 = vmatpush2.bf16.msra.mxu0 0
        %1523 = vmatprep.subr.bf16.mxu0 0
        %1524 = vmatpush2.bf16.msra.mxu0 0
        %1525 = vmatprep.subr.bf16.mxu0 0
        %1526 = vmatpush2.bf16.msra.mxu0 0
        %1527 = vmatprep.subr.bf16.mxu0 0
        %1528 = vmatpush2.bf16.msra.mxu0 0
        %1529 = vmatprep.subr.bf16.mxu0 0
        %1530 = vmatpush2.bf16.msra.mxu0 0
        %1531 = vmatprep.subr.bf16.mxu0 0
        %1532 = vmatpush2.bf16.msra.mxu0 0
        %1533 = vmatprep.subr.bf16.mxu0 0
        %1534 = vmatpush2.bf16.msra.mxu0 0
        %1535 = vmatprep.subr.bf16.mxu0 0
        %1536 = vmatpush2.bf16.msra.mxu0 0
        %1537 = vmatprep.mubr.bf16.mxu0 0
        %1538 = vmatmul.mubr.bf16.gmra.mxu0 %v1469
        %v1539 = vpop.f32.mrf.mxu0
        %v1540 = vadd.f32 0.0, %v1539
        %v1541 = vpop.f32.mrf.mxu0
        %v1542 = vpop.f32.mrf.mxu0
        %v1543 = vadd.f32 0.0, %v1542
        %v1544 = vpop.f32.mrf.mxu0
        %1545 = vmatprep.mubr.bf16.mxu0 0
        %1546 = vmatmul.mubr.bf16.gmra.mxu0 %v1471
        %v1547 = vpop.f32.mrf.mxu0
        %v1548 = vadd.f32 0.0, %v1547
        %v1549 = vpop.f32.mrf.mxu0
        %v1550 = vpop.f32.mrf.mxu0
        %v1551 = vadd.f32 0.0, %v1550
        %v1552 = vpop.f32.mrf.mxu0
        %1553 = vmatprep.mubr.bf16.mxu0 0
        %1554 = vmatmul.mubr.bf16.gmra.mxu0 %v1473
        %v1555 = vpop.f32.mrf.mxu0
        %v1556 = vadd.f32 0.0, %v1555
        %v1557 = vpop.f32.mrf.mxu0
        %v1558 = vpop.f32.mrf.mxu0
        %v1559 = vadd.f32 0.0, %v1558
        %v1560 = vpop.f32.mrf.mxu0
        %1561 = vmatprep.mubr.bf16.mxu0 0
        %1562 = vmatmul.mubr.bf16.gmra.mxu0 %v1475
        %v1563 = vpop.f32.mrf.mxu0
        %v1564 = vadd.f32 0.0, %v1563
        %v1565 = vpop.f32.mrf.mxu0
        %v1566 = vpop.f32.mrf.mxu0
        %v1567 = vadd.f32 0.0, %v1566
        %v1568 = vpop.f32.mrf.mxu0
        %1569 = vmatprep.mubr.bf16.mxu0 0
        %1570 = vmatmul.mubr.bf16.gmra.mxu0 %v1477
        %v1571 = vpop.f32.mrf.mxu0
        %v1572 = vadd.f32 0.0, %v1571
        %v1573 = vpop.f32.mrf.mxu0
        %v1574 = vpop.f32.mrf.mxu0
        %v1575 = vadd.f32 0.0, %v1574
        %v1576 = vpop.f32.mrf.mxu0
        %1577 = vmatprep.mubr.bf16.mxu0 0
        %1578 = vmatmul.mubr.bf16.gmra.mxu0 %v1479
        %v1579 = vpop.f32.mrf.mxu0
        %v1580 = vadd.f32 0.0, %v1579
        %v1581 = vpop.f32.mrf.mxu0
        %v1582 = vpop.f32.mrf.mxu0
        %v1583 = vadd.f32 0.0, %v1582
        %v1584 = vpop.f32.mrf.mxu0
        %1585 = vmatprep.mubr.bf16.mxu0 0
        %1586 = vmatmul.mubr.bf16.gmra.mxu0 %v1481
        %v1587 = vpop.f32.mrf.mxu0
        %v1588 = vadd.f32 0.0, %v1587
        %v1589 = vpop.f32.mrf.mxu0
        %v1590 = vpop.f32.mrf.mxu0
        %v1591 = vadd.f32 0.0, %v1590
        %v1592 = vpop.f32.mrf.mxu0
        %1593 = vmatprep.mubr.bf16.mxu0 0
        %1594 = vmatmul.mubr.bf16.gmra.mxu0 %v1483
        %v1595 = vpop.f32.mrf.mxu0
        %v1596 = vadd.f32 0.0, %v1595
        %v1597 = vpop.f32.mrf.mxu0
        %v1598 = vpop.f32.mrf.mxu0
        %v1599 = vadd.f32 0.0, %v1598
        %v1600 = vpop.f32.mrf.mxu0
        %1601 = vmatprep.mubr.bf16.mxu0 0
        %1602 = vmatmul.mubr.bf16.gmra.mxu0 %v1485
        %v1603 = vpop.f32.mrf.mxu0
        %v1604 = vadd.f32 0.0, %v1603
        %v1605 = vpop.f32.mrf.mxu0
        %v1606 = vpop.f32.mrf.mxu0
        %v1607 = vadd.f32 0.0, %v1606
        %v1608 = vpop.f32.mrf.mxu0
        %1609 = vmatprep.mubr.bf16.mxu0 0
        %1610 = vmatmul.mubr.bf16.gmra.mxu0 %v1487
        %v1611 = vpop.f32.mrf.mxu0
        %v1612 = vadd.f32 0.0, %v1611
        %v1613 = vpop.f32.mrf.mxu0
        %v1614 = vpop.f32.mrf.mxu0
        %v1615 = vadd.f32 0.0, %v1614
        %v1616 = vpop.f32.mrf.mxu0
        %1617 = vmatprep.mubr.bf16.mxu0 0
        %1618 = vmatmul.mubr.bf16.gmra.mxu0 %v1489
        %v1619 = vpop.f32.mrf.mxu0
        %v1620 = vadd.f32 0.0, %v1619
        %v1621 = vpop.f32.mrf.mxu0
        %v1622 = vpop.f32.mrf.mxu0
        %v1623 = vadd.f32 0.0, %v1622
        %v1624 = vpop.f32.mrf.mxu0
        %1625 = vmatprep.mubr.bf16.mxu0 0
        %1626 = vmatmul.mubr.bf16.gmra.mxu0 %v1491
        %v1627 = vpop.f32.mrf.mxu0
        %v1628 = vadd.f32 0.0, %v1627
        %v1629 = vpop.f32.mrf.mxu0
        %v1630 = vpop.f32.mrf.mxu0
        %v1631 = vadd.f32 0.0, %v1630
        %v1632 = vpop.f32.mrf.mxu0
        %1633 = vmatprep.mubr.bf16.mxu0 0
        %1634 = vmatmul.mubr.bf16.gmra.mxu0 %v1493
        %v1635 = vpop.f32.mrf.mxu0
        %v1636 = vadd.f32 0.0, %v1635
        %v1637 = vpop.f32.mrf.mxu0
        %v1638 = vpop.f32.mrf.mxu0
        %v1639 = vadd.f32 0.0, %v1638
        %v1640 = vpop.f32.mrf.mxu0
        %1641 = vmatprep.mubr.bf16.mxu0 0
        %1642 = vmatmul.mubr.bf16.gmra.mxu0 %v1495
        %v1643 = vpop.f32.mrf.mxu0
        %v1644 = vadd.f32 0.0, %v1643
        %v1645 = vpop.f32.mrf.mxu0
        %v1646 = vpop.f32.mrf.mxu0
        %v1647 = vadd.f32 0.0, %v1646
        %v1648 = vpop.f32.mrf.mxu0
        %1649 = vmatprep.mubr.bf16.mxu0 0
        %1650 = vmatmul.mubr.bf16.gmra.mxu0 %v1497
        %v1651 = vpop.f32.mrf.mxu0
        %v1652 = vadd.f32 0.0, %v1651
        %v1653 = vpop.f32.mrf.mxu0
        %v1654 = vpop.f32.mrf.mxu0
        %v1655 = vadd.f32 0.0, %v1654
        %v1656 = vpop.f32.mrf.mxu0
        %1657 = vmatprep.mubr.bf16.mxu0 0
        %1658 = vmatmul.mubr.bf16.gmra.mxu0 %v1499
        %v1659 = vpop.f32.mrf.mxu0
        %v1660 = vadd.f32 0.0, %v1659
        %v1661 = vpop.f32.mrf.mxu0
        %v1662 = vpop.f32.mrf.mxu0
        %v1663 = vadd.f32 0.0, %v1662
        %v1664 = vpop.f32.mrf.mxu0
        %1665 = vdwg.mxu0
        %v1669 = vunpack.c.l.b16 %v1450
        %v1670 = vunpack.c.l.b16 %v1451
        %v1671 = vunpack.c.l.b16 %v1452
        %v1672 = vpack.c.b16 %v1670, %v1669
        %v1673 = vpack.c.b16 %v1671, %v1671
        %v1676 = vsel %vm1468, 0, 0
        %v1679 = vsel %vm1501, %v1673, 0
        %1681 = vmatprep.subr.bf16.mxu0 0
        %1682 = vmatpush1.bf16.msra.mxu0 0
        %1683 = vmatprep.subr.bf16.mxu0 0
        %1684 = vmatpush1.bf16.msra.mxu0 0
        %1685 = vmatprep.subr.bf16.mxu0 0
        %1686 = vmatpush1.bf16.msra.mxu0 0
        %1687 = vmatprep.subr.bf16.mxu0 0
        %1688 = vmatpush1.bf16.msra.mxu0 0
        %1689 = vmatprep.subr.bf16.mxu0 0
        %1690 = vmatpush1.bf16.msra.mxu0 0
        %1691 = vmatprep.subr.bf16.mxu0 0
        %1692 = vmatpush1.bf16.msra.mxu0 0
        %1693 = vmatprep.subr.bf16.mxu0 0
        %1694 = vmatpush1.bf16.msra.mxu0 %v1679
        %1695 = vmatprep.subr.bf16.mxu0 0
        %1696 = vmatpush1.bf16.msra.mxu0 %v1672
        %1697 = vmatprep.subr.bf16.mxu0 0
        %1698 = vmatpush2.bf16.msra.mxu0 0
        %1699 = vmatprep.subr.bf16.mxu0 0
        %1700 = vmatpush2.bf16.msra.mxu0 0
        %1701 = vmatprep.subr.bf16.mxu0 0
        %1702 = vmatpush2.bf16.msra.mxu0 0
        %1703 = vmatprep.subr.bf16.mxu0 0
        %1704 = vmatpush2.bf16.msra.mxu0 0
        %1705 = vmatprep.subr.bf16.mxu0 0
        %1706 = vmatpush2.bf16.msra.mxu0 0
        %1707 = vmatprep.subr.bf16.mxu0 0
        %1708 = vmatpush2.bf16.msra.mxu0 0
        %1709 = vmatprep.subr.bf16.mxu0 0
        %1710 = vmatpush2.bf16.msra.mxu0 0
        %1711 = vmatprep.subr.bf16.mxu0 0
        %1712 = vmatpush2.bf16.msra.mxu0 0
        %1713 = vmatprep.mubr.bf16.mxu0 0
        %1714 = vmatmul.mubr.bf16.gmra.mxu0 %v1676
        %v1715 = vpop.f32.mrf.mxu0
        %v1716 = vadd.f32 %v1540, %v1715
        %v1717 = vpop.f32.mrf.mxu0
        %v1718 = vpop.f32.mrf.mxu0
        %v1719 = vadd.f32 %v1543, %v1718
        %v1720 = vpop.f32.mrf.mxu0
        %1721 = vmatprep.mubr.bf16.mxu0 0
        %1722 = vmatmul.mubr.bf16.gmra.mxu0 %v1469
        %v1723 = vpop.f32.mrf.mxu0
        %v1724 = vadd.f32 %v1548, %v1723
        %v1725 = vpop.f32.mrf.mxu0
        %v1726 = vpop.f32.mrf.mxu0
        %v1727 = vadd.f32 %v1551, %v1726
        %v1728 = vpop.f32.mrf.mxu0
        %1729 = vmatprep.mubr.bf16.mxu0 0
        %1730 = vmatmul.mubr.bf16.gmra.mxu0 %v1471
        %v1731 = vpop.f32.mrf.mxu0
        %v1732 = vadd.f32 %v1556, %v1731
        %v1733 = vpop.f32.mrf.mxu0
        %v1734 = vpop.f32.mrf.mxu0
        %v1735 = vadd.f32 %v1559, %v1734
        %v1736 = vpop.f32.mrf.mxu0
        %1737 = vmatprep.mubr.bf16.mxu0 0
        %1738 = vmatmul.mubr.bf16.gmra.mxu0 %v1473
        %v1739 = vpop.f32.mrf.mxu0
        %v1740 = vadd.f32 %v1564, %v1739
        %v1741 = vpop.f32.mrf.mxu0
        %v1742 = vpop.f32.mrf.mxu0
        %v1743 = vadd.f32 %v1567, %v1742
        %v1744 = vpop.f32.mrf.mxu0
        %1745 = vmatprep.mubr.bf16.mxu0 0
        %1746 = vmatmul.mubr.bf16.gmra.mxu0 %v1475
        %v1747 = vpop.f32.mrf.mxu0
        %v1748 = vadd.f32 %v1572, %v1747
        %v1749 = vpop.f32.mrf.mxu0
        %v1750 = vpop.f32.mrf.mxu0
        %v1751 = vadd.f32 %v1575, %v1750
        %v1752 = vpop.f32.mrf.mxu0
        %1753 = vmatprep.mubr.bf16.mxu0 0
        %1754 = vmatmul.mubr.bf16.gmra.mxu0 %v1477
        %v1755 = vpop.f32.mrf.mxu0
        %v1756 = vadd.f32 %v1580, %v1755
        %v1757 = vpop.f32.mrf.mxu0
        %v1758 = vpop.f32.mrf.mxu0
        %v1759 = vadd.f32 %v1583, %v1758
        %v1760 = vpop.f32.mrf.mxu0
        %1761 = vmatprep.mubr.bf16.mxu0 0
        %1762 = vmatmul.mubr.bf16.gmra.mxu0 %v1479
        %v1763 = vpop.f32.mrf.mxu0
        %v1764 = vadd.f32 %v1588, %v1763
        %v1765 = vpop.f32.mrf.mxu0
        %v1766 = vpop.f32.mrf.mxu0
        %v1767 = vadd.f32 %v1591, %v1766
        %v1768 = vpop.f32.mrf.mxu0
        %1769 = vmatprep.mubr.bf16.mxu0 0
        %1770 = vmatmul.mubr.bf16.gmra.mxu0 %v1481
        %v1771 = vpop.f32.mrf.mxu0
        %v1772 = vadd.f32 %v1596, %v1771
        %v1773 = vpop.f32.mrf.mxu0
        %v1774 = vpop.f32.mrf.mxu0
        %v1775 = vadd.f32 %v1599, %v1774
        %v1776 = vpop.f32.mrf.mxu0
        %1777 = vmatprep.mubr.bf16.mxu0 0
        %1778 = vmatmul.mubr.bf16.gmra.mxu0 %v1483
        %v1779 = vpop.f32.mrf.mxu0
        %v1780 = vadd.f32 %v1604, %v1779
        %v1781 = vpop.f32.mrf.mxu0
        %v1782 = vpop.f32.mrf.mxu0
        %v1783 = vadd.f32 %v1607, %v1782
        %v1784 = vpop.f32.mrf.mxu0
        %1785 = vmatprep.mubr.bf16.mxu0 0
        %1786 = vmatmul.mubr.bf16.gmra.mxu0 %v1485
        %v1787 = vpop.f32.mrf.mxu0
        %v1788 = vadd.f32 %v1612, %v1787
        %v1789 = vpop.f32.mrf.mxu0
        %v1790 = vpop.f32.mrf.mxu0
        %v1791 = vadd.f32 %v1615, %v1790
        %v1792 = vpop.f32.mrf.mxu0
        %1793 = vmatprep.mubr.bf16.mxu0 0
        %1794 = vmatmul.mubr.bf16.gmra.mxu0 %v1487
        %v1795 = vpop.f32.mrf.mxu0
        %v1796 = vadd.f32 %v1620, %v1795
        %v1797 = vpop.f32.mrf.mxu0
        %v1798 = vpop.f32.mrf.mxu0
        %v1799 = vadd.f32 %v1623, %v1798
        %v1800 = vpop.f32.mrf.mxu0
        %1801 = vmatprep.mubr.bf16.mxu0 0
        %1802 = vmatmul.mubr.bf16.gmra.mxu0 %v1489
        %v1803 = vpop.f32.mrf.mxu0
        %v1804 = vadd.f32 %v1628, %v1803
        %v1805 = vpop.f32.mrf.mxu0
        %v1806 = vpop.f32.mrf.mxu0
        %v1807 = vadd.f32 %v1631, %v1806
        %v1808 = vpop.f32.mrf.mxu0
        %1809 = vmatprep.mubr.bf16.mxu0 0
        %1810 = vmatmul.mubr.bf16.gmra.mxu0 %v1491
        %v1811 = vpop.f32.mrf.mxu0
        %v1812 = vadd.f32 %v1636, %v1811
        %v1813 = vpop.f32.mrf.mxu0
        %v1814 = vpop.f32.mrf.mxu0
        %v1815 = vadd.f32 %v1639, %v1814
        %v1816 = vpop.f32.mrf.mxu0
        %1817 = vmatprep.mubr.bf16.mxu0 0
        %1818 = vmatmul.mubr.bf16.gmra.mxu0 %v1493
        %v1819 = vpop.f32.mrf.mxu0
        %v1820 = vadd.f32 %v1644, %v1819
        %v1821 = vpop.f32.mrf.mxu0
        %v1822 = vpop.f32.mrf.mxu0
        %v1823 = vadd.f32 %v1647, %v1822
        %v1824 = vpop.f32.mrf.mxu0
        %1825 = vmatprep.mubr.bf16.mxu0 0
        %1826 = vmatmul.mubr.bf16.gmra.mxu0 %v1495
        %v1827 = vpop.f32.mrf.mxu0
        %v1828 = vadd.f32 %v1652, %v1827
        %v1829 = vpop.f32.mrf.mxu0
        %v1830 = vpop.f32.mrf.mxu0
        %v1831 = vadd.f32 %v1655, %v1830
        %v1832 = vpop.f32.mrf.mxu0
        %1833 = vmatprep.mubr.bf16.mxu0 0
        %1834 = vmatmul.mubr.bf16.gmra.mxu0 %v1497
        %v1835 = vpop.f32.mrf.mxu0
        %v1836 = vadd.f32 %v1660, %v1835
        %v1837 = vpop.f32.mrf.mxu0
        %v1838 = vpop.f32.mrf.mxu0
        %v1839 = vadd.f32 %v1663, %v1838
        %v1840 = vpop.f32.mrf.mxu0
        %1841 = vdwg.mxu0
        %v1845 = vunpack.c.l.b16 %v1456
        %v1846 = vunpack.c.l.b16 %v1457
        %v1847 = vunpack.c.l.b16 %v1458
        %v1848 = vpack.c.b16 %v1846, %v1845
        %v1849 = vpack.c.b16 %v1847, %v1847
        %v1852 = vsel %vm1501, %v1849, 0
        %1854 = vmatprep.subr.bf16.mxu0 0
        %1855 = vmatpush1.bf16.msra.mxu0 0
        %1856 = vmatprep.subr.bf16.mxu0 0
        %1857 = vmatpush1.bf16.msra.mxu0 0
        %1858 = vmatprep.subr.bf16.mxu0 0
        %1859 = vmatpush1.bf16.msra.mxu0 0
        %1860 = vmatprep.subr.bf16.mxu0 0
        %1861 = vmatpush1.bf16.msra.mxu0 0
        %1862 = vmatprep.subr.bf16.mxu0 0
        %1863 = vmatpush1.bf16.msra.mxu0 0
        %1864 = vmatprep.subr.bf16.mxu0 0
        %1865 = vmatpush1.bf16.msra.mxu0 0
        %1866 = vmatprep.subr.bf16.mxu0 0
        %1867 = vmatpush1.bf16.msra.mxu0 %v1852
        %1868 = vmatprep.subr.bf16.mxu0 0
        %1869 = vmatpush1.bf16.msra.mxu0 %v1848
        %1870 = vmatprep.subr.bf16.mxu0 0
        %1871 = vmatpush2.bf16.msra.mxu0 0
        %1872 = vmatprep.subr.bf16.mxu0 0
        %1873 = vmatpush2.bf16.msra.mxu0 0
        %1874 = vmatprep.subr.bf16.mxu0 0
        %1875 = vmatpush2.bf16.msra.mxu0 0
        %1876 = vmatprep.subr.bf16.mxu0 0
        %1877 = vmatpush2.bf16.msra.mxu0 0
        %1878 = vmatprep.subr.bf16.mxu0 0
        %1879 = vmatpush2.bf16.msra.mxu0 0
        %1880 = vmatprep.subr.bf16.mxu0 0
        %1881 = vmatpush2.bf16.msra.mxu0 0
        %1882 = vmatprep.subr.bf16.mxu0 0
        %1883 = vmatpush2.bf16.msra.mxu0 0
        %1884 = vmatprep.subr.bf16.mxu0 0
        %1885 = vmatpush2.bf16.msra.mxu0 0
        %1886 = vmatprep.mubr.bf16.mxu0 0
        %1887 = vmatmul.mubr.bf16.gmra.mxu0 %v1471
        %v1888 = vpop.f32.mrf.mxu0
        %v1889 = vadd.f32 0.0, %v1888
        %v1890 = vpop.f32.mrf.mxu0
        %v1891 = vpop.f32.mrf.mxu0
        %v1892 = vadd.f32 0.0, %v1891
        %v1893 = vpop.f32.mrf.mxu0
        %1894 = vmatprep.mubr.bf16.mxu0 0
        %1895 = vmatmul.mubr.bf16.gmra.mxu0 %v1473
        %v1896 = vpop.f32.mrf.mxu0
        %v1897 = vadd.f32 0.0, %v1896
        %v1898 = vpop.f32.mrf.mxu0
        %v1899 = vpop.f32.mrf.mxu0
        %v1900 = vadd.f32 0.0, %v1899
        %v1901 = vpop.f32.mrf.mxu0
        %1902 = vmatprep.mubr.bf16.mxu0 0
        %1903 = vmatmul.mubr.bf16.gmra.mxu0 %v1475
        %v1904 = vpop.f32.mrf.mxu0
        %v1905 = vadd.f32 0.0, %v1904
        %v1906 = vpop.f32.mrf.mxu0
        %v1907 = vpop.f32.mrf.mxu0
        %v1908 = vadd.f32 0.0, %v1907
        %v1909 = vpop.f32.mrf.mxu0
        %1910 = vmatprep.mubr.bf16.mxu0 0
        %1911 = vmatmul.mubr.bf16.gmra.mxu0 %v1477
        %v1912 = vpop.f32.mrf.mxu0
        %v1913 = vadd.f32 0.0, %v1912
        %v1914 = vpop.f32.mrf.mxu0
        %v1915 = vpop.f32.mrf.mxu0
        %v1916 = vadd.f32 0.0, %v1915
        %v1917 = vpop.f32.mrf.mxu0
        %1918 = vmatprep.mubr.bf16.mxu0 0
        %1919 = vmatmul.mubr.bf16.gmra.mxu0 %v1479
        %v1920 = vpop.f32.mrf.mxu0
        %v1921 = vadd.f32 0.0, %v1920
        %v1922 = vpop.f32.mrf.mxu0
        %v1923 = vpop.f32.mrf.mxu0
        %v1924 = vadd.f32 0.0, %v1923
        %v1925 = vpop.f32.mrf.mxu0
        %1926 = vmatprep.mubr.bf16.mxu0 0
        %1927 = vmatmul.mubr.bf16.gmra.mxu0 %v1481
        %v1928 = vpop.f32.mrf.mxu0
        %v1929 = vadd.f32 0.0, %v1928
        %v1930 = vpop.f32.mrf.mxu0
        %v1931 = vpop.f32.mrf.mxu0
        %v1932 = vadd.f32 0.0, %v1931
        %v1933 = vpop.f32.mrf.mxu0
        %1934 = vmatprep.mubr.bf16.mxu0 0
        %1935 = vmatmul.mubr.bf16.gmra.mxu0 %v1483
        %v1936 = vpop.f32.mrf.mxu0
        %v1937 = vadd.f32 0.0, %v1936
        %v1938 = vpop.f32.mrf.mxu0
        %v1939 = vpop.f32.mrf.mxu0
        %v1940 = vadd.f32 0.0, %v1939
        %v1941 = vpop.f32.mrf.mxu0
        %1942 = vmatprep.mubr.bf16.mxu0 0
        %1943 = vmatmul.mubr.bf16.gmra.mxu0 %v1485
        %v1944 = vpop.f32.mrf.mxu0
        %v1945 = vadd.f32 0.0, %v1944
        %v1946 = vpop.f32.mrf.mxu0
        %v1947 = vpop.f32.mrf.mxu0
        %v1948 = vadd.f32 0.0, %v1947
        %v1949 = vpop.f32.mrf.mxu0
        %1950 = vmatprep.mubr.bf16.mxu0 0
        %1951 = vmatmul.mubr.bf16.gmra.mxu0 %v1487
        %v1952 = vpop.f32.mrf.mxu0
        %v1953 = vadd.f32 0.0, %v1952
        %v1954 = vpop.f32.mrf.mxu0
        %v1955 = vpop.f32.mrf.mxu0
        %v1956 = vadd.f32 0.0, %v1955
        %v1957 = vpop.f32.mrf.mxu0
        %1958 = vmatprep.mubr.bf16.mxu0 0
        %1959 = vmatmul.mubr.bf16.gmra.mxu0 %v1489
        %v1960 = vpop.f32.mrf.mxu0
        %v1961 = vadd.f32 0.0, %v1960
        %v1962 = vpop.f32.mrf.mxu0
        %v1963 = vpop.f32.mrf.mxu0
        %v1964 = vadd.f32 0.0, %v1963
        %v1965 = vpop.f32.mrf.mxu0
        %1966 = vmatprep.mubr.bf16.mxu0 0
        %1967 = vmatmul.mubr.bf16.gmra.mxu0 %v1491
        %v1968 = vpop.f32.mrf.mxu0
        %v1969 = vadd.f32 0.0, %v1968
        %v1970 = vpop.f32.mrf.mxu0
        %v1971 = vpop.f32.mrf.mxu0
        %v1972 = vadd.f32 0.0, %v1971
        %v1973 = vpop.f32.mrf.mxu0
        %1974 = vmatprep.mubr.bf16.mxu0 0
        %1975 = vmatmul.mubr.bf16.gmra.mxu0 %v1493
        %v1976 = vpop.f32.mrf.mxu0
        %v1977 = vadd.f32 0.0, %v1976
        %v1978 = vpop.f32.mrf.mxu0
        %v1979 = vpop.f32.mrf.mxu0
        %v1980 = vadd.f32 0.0, %v1979
        %v1981 = vpop.f32.mrf.mxu0
        %1982 = vmatprep.mubr.bf16.mxu0 0
        %1983 = vmatmul.mubr.bf16.gmra.mxu0 %v1495
        %v1984 = vpop.f32.mrf.mxu0
        %v1985 = vadd.f32 0.0, %v1984
        %v1986 = vpop.f32.mrf.mxu0
        %v1987 = vpop.f32.mrf.mxu0
        %v1988 = vadd.f32 0.0, %v1987
        %v1989 = vpop.f32.mrf.mxu0
        %1990 = vmatprep.mubr.bf16.mxu0 0
        %1991 = vmatmul.mubr.bf16.gmra.mxu0 %v1497
        %v1992 = vpop.f32.mrf.mxu0
        %v1993 = vadd.f32 0.0, %v1992
        %v1994 = vpop.f32.mrf.mxu0
        %v1995 = vpop.f32.mrf.mxu0
        %v1996 = vadd.f32 0.0, %v1995
        %v1997 = vpop.f32.mrf.mxu0
        %1998 = vmatprep.mubr.bf16.mxu0 0
        %1999 = vmatmul.mubr.bf16.gmra.mxu0 %v1499
        %v2000 = vpop.f32.mrf.mxu0
        %v2001 = vadd.f32 0.0, %v2000
        %v2002 = vpop.f32.mrf.mxu0
        %v2003 = vpop.f32.mrf.mxu0
        %v2004 = vadd.f32 0.0, %v2003
        %v2005 = vpop.f32.mrf.mxu0
        %2006 = vmatprep.mubr.bf16.mxu0 0
        %2007 = vmatmul.mubr.bf16.gmra.mxu0 %v1676
        %v2008 = vpop.f32.mrf.mxu0
        %v2009 = vadd.f32 0.0, %v2008
        %v2010 = vpop.f32.mrf.mxu0
        %v2011 = vpop.f32.mrf.mxu0
        %v2012 = vadd.f32 0.0, %v2011
        %v2013 = vpop.f32.mrf.mxu0
        %2014 = vdwg.mxu0
        %v2015 = vadd.f32 %v1716, %v1889
        %v2016 = vadd.f32 %v1719, %v1892
        %v2017 = vadd.f32 %v1724, %v1897
        %v2018 = vadd.f32 %v1727, %v1900
        %v2019 = vadd.f32 %v1732, %v1905
        %v2020 = vadd.f32 %v1735, %v1908
        %v2021 = vadd.f32 %v1740, %v1913
        %v2022 = vadd.f32 %v1743, %v1916
        %v2023 = vadd.f32 %v1748, %v1921
        %v2024 = vadd.f32 %v1751, %v1924
        %v2025 = vadd.f32 %v1756, %v1929
        %v2026 = vadd.f32 %v1759, %v1932
        %v2027 = vadd.f32 %v1764, %v1937
        %v2028 = vadd.f32 %v1767, %v1940
        %v2029 = vadd.f32 %v1772, %v1945
        %v2030 = vadd.f32 %v1775, %v1948
        %v2031 = vadd.f32 %v1780, %v1953
        %v2032 = vadd.f32 %v1783, %v1956
        %v2033 = vadd.f32 %v1788, %v1961
        %v2034 = vadd.f32 %v1791, %v1964
        %v2035 = vadd.f32 %v1796, %v1969
        %v2036 = vadd.f32 %v1799, %v1972
        %v2037 = vadd.f32 %v1804, %v1977
        %v2038 = vadd.f32 %v1807, %v1980
        %v2039 = vadd.f32 %v1812, %v1985
        %v2040 = vadd.f32 %v1815, %v1988
        %v2041 = vadd.f32 %v1820, %v1993
        %v2042 = vadd.f32 %v1823, %v1996
        %v2043 = vadd.f32 %v1828, %v2001
        %v2044 = vadd.f32 %v1831, %v2004
        %v2045 = vadd.f32 %v1836, %v2009
        %v2046 = vadd.f32 %v1839, %v2012
        %v2047 = vld [vmem:[%s401] sm:$0x1]
        %v2049 = vlaneseq
        %v2050 = vshrl.u32 %v2049, 7
        %v2051 = vsub.s32 0, %v2050
        %v2052 = vrot.slane %v2047, %v2051
        %v2054 = vmul.f32 %v2015, %v2052
        %v2055 = vmul.f32 %v2016, %v2052
        %v2056 = vmul.f32 %v2017, %v2052
        %v2057 = vmul.f32 %v2018, %v2052
        %v2058 = vmul.f32 %v2019, %v2052
        %v2059 = vmul.f32 %v2020, %v2052
        %v2060 = vmul.f32 %v2021, %v2052
        %v2061 = vmul.f32 %v2022, %v2052
        %v2062 = vmul.f32 %v2023, %v2052
        %v2063 = vmul.f32 %v2024, %v2052
        %v2064 = vmul.f32 %v2025, %v2052
        %v2065 = vmul.f32 %v2026, %v2052
        %v2066 = vmul.f32 %v2027, %v2052
        %v2067 = vmul.f32 %v2028, %v2052
        %v2068 = vmul.f32 %v2029, %v2052
        %v2069 = vmul.f32 %v2030, %v2052
        %v2070 = vmul.f32 %v2031, %v2052
        %v2071 = vmul.f32 %v2032, %v2052
        %v2072 = vmul.f32 %v2033, %v2052
        %v2073 = vmul.f32 %v2034, %v2052
        %v2074 = vmul.f32 %v2035, %v2052
        %v2075 = vmul.f32 %v2036, %v2052
        %v2076 = vmul.f32 %v2037, %v2052
        %v2077 = vmul.f32 %v2038, %v2052
        %v2078 = vmul.f32 %v2039, %v2052
        %v2079 = vmul.f32 %v2040, %v2052
        %v2080 = vmul.f32 %v2041, %v2052
        %v2081 = vmul.f32 %v2042, %v2052
        %v2082 = vmul.f32 %v2043, %v2052
        %v2083 = vmul.f32 %v2044, %v2052
        %v2084 = vmul.f32 %v2045, %v2052
        %v2085 = vmul.f32 %v2046, %v2052
        %v2086 = vld [vmem:[%s404] sm:$0x1]
        %v2088 = vlaneseq
        %v2089 = vshrl.u32 %v2088, 7
        %v2090 = vsub.s32 0, %v2089
        %v2091 = vrot.slane %v2086, %v2090
        %v2093 = vadd.f32 %v2054, %v2091
        %v2094 = vadd.f32 %v2055, %v2091
        %v2095 = vadd.f32 %v2056, %v2091
        %v2096 = vadd.f32 %v2057, %v2091
        %v2097 = vadd.f32 %v2058, %v2091
        %v2098 = vadd.f32 %v2059, %v2091
        %v2099 = vadd.f32 %v2060, %v2091
        %v2100 = vadd.f32 %v2061, %v2091
        %v2101 = vadd.f32 %v2062, %v2091
        %v2102 = vadd.f32 %v2063, %v2091
        %v2103 = vadd.f32 %v2064, %v2091
        %v2104 = vadd.f32 %v2065, %v2091
        %v2105 = vadd.f32 %v2066, %v2091
        %v2106 = vadd.f32 %v2067, %v2091
        %v2107 = vadd.f32 %v2068, %v2091
        %v2108 = vadd.f32 %v2069, %v2091
        %v2109 = vadd.f32 %v2070, %v2091
        %v2110 = vadd.f32 %v2071, %v2091
        %v2111 = vadd.f32 %v2072, %v2091
        %v2112 = vadd.f32 %v2073, %v2091
        %v2113 = vadd.f32 %v2074, %v2091
        %v2114 = vadd.f32 %v2075, %v2091
        %v2115 = vadd.f32 %v2076, %v2091
        %v2116 = vadd.f32 %v2077, %v2091
        %v2117 = vadd.f32 %v2078, %v2091
        %v2118 = vadd.f32 %v2079, %v2091
        %v2119 = vadd.f32 %v2080, %v2091
        %v2120 = vadd.f32 %v2081, %v2091
        %v2121 = vadd.f32 %v2082, %v2091
        %v2122 = vadd.f32 %v2083, %v2091
        %v2123 = vadd.f32 %v2084, %v2091
        %v2124 = vadd.f32 %v2085, %v2091
        %v2125 = vxor.u32 %v2093, 2147483648
        %v2126 = vxor.u32 %v2094, 2147483648
        %v2127 = vxor.u32 %v2095, 2147483648
        %v2128 = vxor.u32 %v2096, 2147483648
        %v2129 = vxor.u32 %v2097, 2147483648
        %v2130 = vxor.u32 %v2098, 2147483648
        %v2131 = vxor.u32 %v2099, 2147483648
        %v2132 = vxor.u32 %v2100, 2147483648
        %v2133 = vxor.u32 %v2101, 2147483648
        %v2134 = vxor.u32 %v2102, 2147483648
        %v2135 = vxor.u32 %v2103, 2147483648
        %v2136 = vxor.u32 %v2104, 2147483648
        %v2137 = vxor.u32 %v2105, 2147483648
        %v2138 = vxor.u32 %v2106, 2147483648
        %v2139 = vxor.u32 %v2107, 2147483648
        %v2140 = vxor.u32 %v2108, 2147483648
        %v2141 = vxor.u32 %v2109, 2147483648
        %v2142 = vxor.u32 %v2110, 2147483648
        %v2143 = vxor.u32 %v2111, 2147483648
        %v2144 = vxor.u32 %v2112, 2147483648
        %v2145 = vxor.u32 %v2113, 2147483648
        %v2146 = vxor.u32 %v2114, 2147483648
        %v2147 = vxor.u32 %v2115, 2147483648
        %v2148 = vxor.u32 %v2116, 2147483648
        %v2149 = vxor.u32 %v2117, 2147483648
        %v2150 = vxor.u32 %v2118, 2147483648
        %v2151 = vxor.u32 %v2119, 2147483648
        %v2152 = vxor.u32 %v2120, 2147483648
        %v2153 = vxor.u32 %v2121, 2147483648
        %v2154 = vxor.u32 %v2122, 2147483648
        %v2155 = vxor.u32 %v2123, 2147483648
        %v2156 = vxor.u32 %v2124, 2147483648
        %v2157 = vmul.f32 %v2125, 1.442695
        %v2158 = vpow.pop %v2157
        %v2159 = vmul.f32 %v2126, 1.442695
        %v2160 = vpow.pop %v2159
        %v2161 = vmul.f32 %v2127, 1.442695
        %v2162 = vpow.pop %v2161
        %v2163 = vmul.f32 %v2128, 1.442695
        %v2164 = vpow.pop %v2163
        %v2165 = vmul.f32 %v2129, 1.442695
        %v2166 = vpow.pop %v2165
        %v2167 = vmul.f32 %v2130, 1.442695
        %v2168 = vpow.pop %v2167
        %v2169 = vmul.f32 %v2131, 1.442695
        %v2170 = vpow.pop %v2169
        %v2171 = vmul.f32 %v2132, 1.442695
        %v2172 = vpow.pop %v2171
        %v2173 = vmul.f32 %v2133, 1.442695
        %v2174 = vpow.pop %v2173
        %v2175 = vmul.f32 %v2134, 1.442695
        %v2176 = vpow.pop %v2175
        %v2177 = vmul.f32 %v2135, 1.442695
        %v2178 = vpow.pop %v2177
        %v2179 = vmul.f32 %v2136, 1.442695
        %v2180 = vpow.pop %v2179
        %v2181 = vmul.f32 %v2137, 1.442695
        %v2182 = vpow.pop %v2181
        %v2183 = vmul.f32 %v2138, 1.442695
        %v2184 = vpow.pop %v2183
        %v2185 = vmul.f32 %v2139, 1.442695
        %v2186 = vpow.pop %v2185
        %v2187 = vmul.f32 %v2140, 1.442695
        %v2188 = vpow.pop %v2187
        %v2189 = vmul.f32 %v2141, 1.442695
        %v2190 = vpow.pop %v2189
        %v2191 = vmul.f32 %v2142, 1.442695
        %v2192 = vpow.pop %v2191
        %v2193 = vmul.f32 %v2143, 1.442695
        %v2194 = vpow.pop %v2193
        %v2195 = vmul.f32 %v2144, 1.442695
        %v2196 = vpow.pop %v2195
        %v2197 = vmul.f32 %v2145, 1.442695
        %v2198 = vpow.pop %v2197
        %v2199 = vmul.f32 %v2146, 1.442695
        %v2200 = vpow.pop %v2199
        %v2201 = vmul.f32 %v2147, 1.442695
        %v2202 = vpow.pop %v2201
        %v2203 = vmul.f32 %v2148, 1.442695
        %v2204 = vpow.pop %v2203
        %v2205 = vmul.f32 %v2149, 1.442695
        %v2206 = vpow.pop %v2205
        %v2207 = vmul.f32 %v2150, 1.442695
        %v2208 = vpow.pop %v2207
        %v2209 = vmul.f32 %v2151, 1.442695
        %v2210 = vpow.pop %v2209
        %v2211 = vmul.f32 %v2152, 1.442695
        %v2212 = vpow.pop %v2211
        %v2213 = vmul.f32 %v2153, 1.442695
        %v2214 = vpow.pop %v2213
        %v2215 = vmul.f32 %v2154, 1.442695
        %v2216 = vpow.pop %v2215
        %v2217 = vmul.f32 %v2155, 1.442695
        %v2218 = vpow.pop %v2217
        %v2219 = vmul.f32 %v2156, 1.442695
        %v2220 = vpow.pop %v2219
        %v2221 = vadd.f32 %v2158, 1.0
        %v2222 = vadd.f32 %v2160, 1.0
        %v2223 = vadd.f32 %v2162, 1.0
        %v2224 = vadd.f32 %v2164, 1.0
        %v2225 = vadd.f32 %v2166, 1.0
        %v2226 = vadd.f32 %v2168, 1.0
        %v2227 = vadd.f32 %v2170, 1.0
        %v2228 = vadd.f32 %v2172, 1.0
        %v2229 = vadd.f32 %v2174, 1.0
        %v2230 = vadd.f32 %v2176, 1.0
        %v2231 = vadd.f32 %v2178, 1.0
        %v2232 = vadd.f32 %v2180, 1.0
        %v2233 = vadd.f32 %v2182, 1.0
        %v2234 = vadd.f32 %v2184, 1.0
        %v2235 = vadd.f32 %v2186, 1.0
        %v2236 = vadd.f32 %v2188, 1.0
        %v2237 = vadd.f32 %v2190, 1.0
        %v2238 = vadd.f32 %v2192, 1.0
        %v2239 = vadd.f32 %v2194, 1.0
        %v2240 = vadd.f32 %v2196, 1.0
        %v2241 = vadd.f32 %v2198, 1.0
        %v2242 = vadd.f32 %v2200, 1.0
        %v2243 = vadd.f32 %v2202, 1.0
        %v2244 = vadd.f32 %v2204, 1.0
        %v2245 = vadd.f32 %v2206, 1.0
        %v2246 = vadd.f32 %v2208, 1.0
        %v2247 = vadd.f32 %v2210, 1.0
        %v2248 = vadd.f32 %v2212, 1.0
        %v2249 = vadd.f32 %v2214, 1.0
        %v2250 = vadd.f32 %v2216, 1.0
        %v2251 = vadd.f32 %v2218, 1.0
        %v2252 = vadd.f32 %v2220, 1.0
        %v2253 = vrcp.pop %v2221
        %v2254 = vmul.f32 1.0, %v2253
        %v2255 = vrcp.pop %v2222
        %v2256 = vmul.f32 1.0, %v2255
        %v2257 = vrcp.pop %v2223
        %v2258 = vmul.f32 1.0, %v2257
        %v2259 = vrcp.pop %v2224
        %v2260 = vmul.f32 1.0, %v2259
        %v2261 = vrcp.pop %v2225
        %v2262 = vmul.f32 1.0, %v2261
        %v2263 = vrcp.pop %v2226
        %v2264 = vmul.f32 1.0, %v2263
        %v2265 = vrcp.pop %v2227
        %v2266 = vmul.f32 1.0, %v2265
        %v2267 = vrcp.pop %v2228
        %v2268 = vmul.f32 1.0, %v2267
        %v2269 = vrcp.pop %v2229
        %v2270 = vmul.f32 1.0, %v2269
        %v2271 = vrcp.pop %v2230
        %v2272 = vmul.f32 1.0, %v2271
        %v2273 = vrcp.pop %v2231
        %v2274 = vmul.f32 1.0, %v2273
        %v2275 = vrcp.pop %v2232
        %v2276 = vmul.f32 1.0, %v2275
        %v2277 = vrcp.pop %v2233
        %v2278 = vmul.f32 1.0, %v2277
        %v2279 = vrcp.pop %v2234
        %v2280 = vmul.f32 1.0, %v2279
        %v2281 = vrcp.pop %v2235
        %v2282 = vmul.f32 1.0, %v2281
        %v2283 = vrcp.pop %v2236
        %v2284 = vmul.f32 1.0, %v2283
        %v2285 = vrcp.pop %v2237
        %v2286 = vmul.f32 1.0, %v2285
        %v2287 = vrcp.pop %v2238
        %v2288 = vmul.f32 1.0, %v2287
        %v2289 = vrcp.pop %v2239
        %v2290 = vmul.f32 1.0, %v2289
        %v2291 = vrcp.pop %v2240
        %v2292 = vmul.f32 1.0, %v2291
        %v2293 = vrcp.pop %v2241
        %v2294 = vmul.f32 1.0, %v2293
        %v2295 = vrcp.pop %v2242
        %v2296 = vmul.f32 1.0, %v2295
        %v2297 = vrcp.pop %v2243
        %v2298 = vmul.f32 1.0, %v2297
        %v2299 = vrcp.pop %v2244
        %v2300 = vmul.f32 1.0, %v2299
        %v2301 = vrcp.pop %v2245
        %v2302 = vmul.f32 1.0, %v2301
        %v2303 = vrcp.pop %v2246
        %v2304 = vmul.f32 1.0, %v2303
        %v2305 = vrcp.pop %v2247
        %v2306 = vmul.f32 1.0, %v2305
        %v2307 = vrcp.pop %v2248
        %v2308 = vmul.f32 1.0, %v2307
        %v2309 = vrcp.pop %v2249
        %v2310 = vmul.f32 1.0, %v2309
        %v2311 = vrcp.pop %v2250
        %v2312 = vmul.f32 1.0, %v2311
        %v2313 = vrcp.pop %v2251
        %v2314 = vmul.f32 1.0, %v2313
        %v2315 = vrcp.pop %v2252
        %v2316 = vmul.f32 1.0, %v2315
        %v2317 = vmul.f32 %v2093, %v2254
        %v2318 = vmul.f32 %v2094, %v2256
        %v2319 = vmul.f32 %v2095, %v2258
        %v2320 = vmul.f32 %v2096, %v2260
        %v2321 = vmul.f32 %v2097, %v2262
        %v2322 = vmul.f32 %v2098, %v2264
        %v2323 = vmul.f32 %v2099, %v2266
        %v2324 = vmul.f32 %v2100, %v2268
        %v2325 = vmul.f32 %v2101, %v2270
        %v2326 = vmul.f32 %v2102, %v2272
        %v2327 = vmul.f32 %v2103, %v2274
        %v2328 = vmul.f32 %v2104, %v2276
        %v2329 = vmul.f32 %v2105, %v2278
        %v2330 = vmul.f32 %v2106, %v2280
        %v2331 = vmul.f32 %v2107, %v2282
        %v2332 = vmul.f32 %v2108, %v2284
        %v2333 = vmul.f32 %v2109, %v2286
        %v2334 = vmul.f32 %v2110, %v2288
        %v2335 = vmul.f32 %v2111, %v2290
        %v2336 = vmul.f32 %v2112, %v2292
        %v2337 = vmul.f32 %v2113, %v2294
        %v2338 = vmul.f32 %v2114, %v2296
        %v2339 = vmul.f32 %v2115, %v2298
        %v2340 = vmul.f32 %v2116, %v2300
        %v2341 = vmul.f32 %v2117, %v2302
        %v2342 = vmul.f32 %v2118, %v2304
        %v2343 = vmul.f32 %v2119, %v2306
        %v2344 = vmul.f32 %v2120, %v2308
        %v2345 = vmul.f32 %v2121, %v2310
        %v2346 = vmul.f32 %v2122, %v2312
        %v2347 = vmul.f32 %v2123, %v2314
        %v2348 = vmul.f32 %v2124, %v2316
        %v2349 = vadd.f32 %v475, %v2317
        %v2350 = vadd.f32 %v476, %v2318
        %v2351 = vadd.f32 %v477, %v2319
        %v2352 = vadd.f32 %v478, %v2320
        %v2353 = vadd.f32 %v479, %v2321
        %v2354 = vadd.f32 %v480, %v2322
        %v2355 = vadd.f32 %v481, %v2323
        %v2356 = vadd.f32 %v482, %v2324
        %v2357 = vadd.f32 %v483, %v2325
        %v2358 = vadd.f32 %v484, %v2326
        %v2359 = vadd.f32 %v485, %v2327
        %v2360 = vadd.f32 %v486, %v2328
        %v2361 = vadd.f32 %v487, %v2329
        %v2362 = vadd.f32 %v488, %v2330
        %v2363 = vadd.f32 %v489, %v2331
        %v2364 = vadd.f32 %v490, %v2332
        %v2365 = vadd.f32 %v491, %v2333
        %v2366 = vadd.f32 %v492, %v2334
        %v2367 = vadd.f32 %v493, %v2335
        %v2368 = vadd.f32 %v494, %v2336
        %v2369 = vadd.f32 %v495, %v2337
        %v2370 = vadd.f32 %v496, %v2338
        %v2371 = vadd.f32 %v497, %v2339
        %v2372 = vadd.f32 %v498, %v2340
        %v2373 = vadd.f32 %v499, %v2341
        %v2374 = vadd.f32 %v500, %v2342
        %v2375 = vadd.f32 %v501, %v2343
        %v2376 = vadd.f32 %v502, %v2344
        %v2377 = vadd.f32 %v503, %v2345
        %v2378 = vadd.f32 %v504, %v2346
        %v2379 = vadd.f32 %v505, %v2347
        %v2380 = vadd.f32 %v506, %v2348
        %2381 = vst.msk [vmem:[%s382] sm:$0xff] %vm531, %v2349
        %2382 = vst.msk [vmem:[%s382 + $0x8] sm:$0xff] %vm531, %v2350
        %2383 = vst.msk [vmem:[%s382 + $0x10] sm:$0xff] %vm531, %v2351
        %2384 = vst.msk [vmem:[%s382 + $0x18] sm:$0xff] %vm531, %v2352
        %2385 = vst.msk [vmem:[%s382 + $0x20] sm:$0xff] %vm531, %v2353
        %2386 = vst.msk [vmem:[%s382 + $0x28] sm:$0xff] %vm531, %v2354
        %2387 = vst.msk [vmem:[%s382 + $0x30] sm:$0xff] %vm531, %v2355
        %2388 = vst.msk [vmem:[%s382 + $0x38] sm:$0xff] %vm531, %v2356
        %2389 = vst.msk [vmem:[%s382 + $0x40] sm:$0xff] %vm531, %v2357
        %2390 = vst.msk [vmem:[%s382 + $0x48] sm:$0xff] %vm531, %v2358
        %2391 = vst.msk [vmem:[%s382 + $0x50] sm:$0xff] %vm531, %v2359
        %2392 = vst.msk [vmem:[%s382 + $0x58] sm:$0xff] %vm531, %v2360
        %2393 = vst.msk [vmem:[%s382 + $0x60] sm:$0xff] %vm531, %v2361
        %2394 = vst.msk [vmem:[%s382 + $0x68] sm:$0xff] %vm531, %v2362
        %2395 = vst.msk [vmem:[%s382 + $0x70] sm:$0xff] %vm531, %v2363
        %2396 = vst.msk [vmem:[%s382 + $0x78] sm:$0xff] %vm531, %v2364
        %2397 = vst.msk [vmem:[%s382 + $0x80] sm:$0xff] %vm531, %v2365
        %2398 = vst.msk [vmem:[%s382 + $0x88] sm:$0xff] %vm531, %v2366
        %2399 = vst.msk [vmem:[%s382 + $0x90] sm:$0xff] %vm531, %v2367
        %2400 = vst.msk [vmem:[%s382 + $0x98] sm:$0xff] %vm531, %v2368
        %2401 = vst.msk [vmem:[%s382 + $0xa0] sm:$0xff] %vm531, %v2369
        %2402 = vst.msk [vmem:[%s382 + $0xa8] sm:$0xff] %vm531, %v2370
        %2403 = vst.msk [vmem:[%s382 + $0xb0] sm:$0xff] %vm531, %v2371
        %2404 = vst.msk [vmem:[%s382 + $0xb8] sm:$0xff] %vm531, %v2372
        %2405 = vst.msk [vmem:[%s382 + $0xc0] sm:$0xff] %vm531, %v2373
        %2406 = vst.msk [vmem:[%s382 + $0xc8] sm:$0xff] %vm531, %v2374
        %2407 = vst.msk [vmem:[%s382 + $0xd0] sm:$0xff] %vm531, %v2375
        %2408 = vst.msk [vmem:[%s382 + $0xd8] sm:$0xff] %vm531, %v2376
        %2409 = vst.msk [vmem:[%s382 + $0xe0] sm:$0xff] %vm531, %v2377
        %2410 = vst.msk [vmem:[%s382 + $0xe8] sm:$0xff] %vm531, %v2378
        %2411 = vst.msk [vmem:[%s382 + $0xf0] sm:$0xff] %vm531, %v2379
        %2412 = vst.msk [vmem:[%s382 + $0xf8] sm:$0xff] %vm531, %v2380
        %s2413 = sand.u32 %s226, 1
        %s2414 = scalar_lea.sflag [#allocation4], %s2413
        %s2415 = sand.u32 %s226, 1
        %s2416 = smul.addr %s2415, 256
        %s2417 = scalar_lea.vmem [#allocation5], %s2416
        // Predicated region
        $region57: #{tpu_custom_call.1} parent=47 // pred_check
          %p2418 = pneg %p236
        $region58: #{tpu_custom_call.1} parent=47 // pred_check_branch
          %2420 = sbr.rel (%p2418) target = $region60
        $region59: #{tpu_custom_call.1} parent=47 // pred_region
          %s2422 = ssub.s32 4096, 4096
          %2423 = vsyncadd %s2414, %s2422
          %s2424 = smul.addr %s28, 32
          %s2425 = smul.addr %s2424, 128
          %s2426 = scalar_lea.hbm %s7, %s2425
          %s2427 = sshll.u32 %s2417, 4
          %s2428 = int_to_ptr.vmem [resolvable:$true] %s2427
          %2433 = dma.vmem_to_hbm [thread:$0]  %s2428, 4096, %s2426, %s2414, 128, 128, 8
        $region60: #{tpu_custom_call.1} parent=47 // pred_fallthru
          _
      $region48: #{tpu_custom_call.1} parent=5 // pred_fallthru
        _
      %p2434 = scmp.le.s32.totalorder 2, %s19
      // Predicated region
      $region61: #{tpu_custom_call.1} parent=5 // pred_check
        %p2435 = pneg %p2434
      $region62: #{tpu_custom_call.1} parent=5 // pred_check_branch
        %2437 = sbr.rel (%p2435) target = $region64
      $region63: #{tpu_custom_call.1} parent=5 // pred_region
        %s2438 = ssub.s32 %s19, 2
        // Predicated region
        $region65: #{tpu_custom_call.1} parent=63 // pred_check
          %p2439 = pneg %p242
        $region66: #{tpu_custom_call.1} parent=63 // pred_check_branch
          %2441 = sbr.rel (%p2439) target = $region68
        $region67: #{tpu_custom_call.1} parent=63 // pred_region
          %s2442 = sand.u32 %s227, 1
          %s2443 = scalar_lea.sflag [#allocation4], %s2442
          %s2444 = sand.u32 %s227, 1
          %s2445 = smul.addr %s2444, 256
          %s2446 = scalar_lea.vmem [#allocation5], %s2445
          %2447 = dma.done %s2443, 4096
        $region68: #{tpu_custom_call.1} parent=63 // pred_fallthru
          _
      $region64: #{tpu_custom_call.1} parent=5 // pred_fallthru
        _
    $region6: #{tpu_custom_call.1} parent=1 // loop_footer
      %s23 = sadd.s32 1, %s19
    $region7: #{tpu_custom_call.1} parent=1 // loop_footer_branch
      %18 = sbr.rel target = $region3
    $region8: #{tpu_custom_call.1} parent=1 // loop_exit
      _
    %2448 = vsyncpa [#allocation3], 1
    %s2449 = scalar_lea.sflag [#allocation3], 1
    %2450 = vsyncpa %s2449, 1
    %2451 = vsyncpa [#allocation4], 1
    %s2452 = scalar_lea.sflag [#allocation4], 1
    %2453 = vsyncpa %s2452, 1

</llo_original>
